<compile_context>
chip_gen: v5e
topology: v5e:2x2
jax: 0.10.0
libtpu: 0.0.40
codegen_flags: <defaults>
</compile_context>

<pallas_src>
import functools

import jax
import jax.numpy as jnp
from jax import lax
from jax.experimental import pallas as pl
from jax.experimental.pallas import tpu as pltpu

LEAKY_SLOPE = 0.01  # PyTorch nn.LeakyReLU default negative_slope


def _concat_conv_kernel(x1_ref, x2_ref, mask_ref, w1a_ref, w1b_ref, b1_ref,
                        w2_ref, b2_ref, o_ref, col_ref, *, H, W):
    # x1_ref, x2_ref: (Bt, CP, HW)  channel-padded inputs, HW on lanes
    # mask_ref:       (9, CP, HW)   per-tap edge masks, pre-broadcast over sublanes
    # w1a/w1b/w2_ref: (CP, 9*CP)    im2col weight matrices (col = (kh*3+kw)*CP + c)
    # b1_ref, b2_ref: (CP, 1)
    # o_ref:          (Bt, C, HW)
    # col_ref:        (9*CP, Bt*HW) VMEM scratch, reused for every im2col build
    f32 = jnp.float32
    HW = H * W
    Bt = x1_ref.shape[0]
    CP = x1_ref.shape[1]
    C = o_ref.shape[1]

    # Tap order (dh, dw) matches the (kh*3+kw)*CP + c weight/column layout.
    shifts = tuple((-(dh * W + dw)) % HW for dh in (-1, 0, 1) for dw in (-1, 0, 1))

    def build_col(get_x):
        """Write the 9-tap im2col matrix of get_x(b) into col_ref (9*CP, Bt*HW)."""
        for b in range(Bt):
            x = get_x(b)                                       # (CP, HW) f32
            for tap, s in enumerate(shifts):
                shifted = x if s == 0 else pltpu.roll(x, shift=s, axis=1)
                # mask kills the row/column wrap-around lanes of the roll
                col_ref[tap * CP:(tap + 1) * CP, b * HW:(b + 1) * HW] = (
                    shifted * mask_ref[tap])

    # ---- conv #1 (2C -> C) + LeakyReLU: two accumulated MXU matmuls, no concat ----
    build_col(lambda b: x1_ref[b].astype(f32))
    a1 = jnp.dot(w1a_ref[...], col_ref[...], preferred_element_type=f32)
    build_col(lambda b: x2_ref[b].astype(f32))
    a1 = a1 + jnp.dot(w1b_ref[...], col_ref[...], preferred_element_type=f32)
    a1 = a1 + b1_ref[...]
    y = jnp.where(a1 > 0, a1, LEAKY_SLOPE * a1)                # (CP, Bt*HW); rows >= C are 0

    # ---- conv #2 (C -> C) + LeakyReLU ----
    build_col(lambda b: y[:, b * HW:(b + 1) * HW])
    a2 = jnp.dot(w2_ref[...], col_ref[...], preferred_element_type=f32) + b2_ref[...]
    out = jnp.where(a2 > 0, a2, LEAKY_SLOPE * a2)              # (CP, Bt*HW)

    for b in range(Bt):
        o_ref[b] = out[:C, b * HW:(b + 1) * HW].astype(o_ref.dtype)


def _conv_weight_to_mat(w_oihw, cout_pad, cin_pad):
    """OIHW (Cout, Cin, 3, 3) -> (cout_pad, 9*cin_pad) im2col weight matrix."""
    co, ci, kh, kw = w_oihw.shape
    w = jnp.transpose(w_oihw, (0, 2, 3, 1))                    # (co, kh, kw, ci)
    if cin_pad != ci:
        w = jnp.pad(w, ((0, 0), (0, 0), (0, 0), (0, cin_pad - ci)))
    w = w.reshape(co, kh * kw * cin_pad)                        # col = (kh*3+kw)*cin_pad + c
    return jnp.pad(w, ((0, cout_pad - co), (0, 0)))


def _edge_masks(H, W, CP):
    """(9, CP, HW): per-tap masks zeroing out-of-image taps (and roll wrap lanes)."""
    HW = H * W
    pos = jnp.arange(HW, dtype=jnp.int32)
    h_pos, w_pos = pos // W, pos % W
    rows = []
    for dh in (-1, 0, 1):
        for dw in (-1, 0, 1):
            m = jnp.ones((HW,), jnp.float32)
            if dh == -1:
                m = m * (h_pos != 0).astype(jnp.float32)
            elif dh == 1:
                m = m * (h_pos != H - 1).astype(jnp.float32)
            if dw == -1:
                m = m * (w_pos != 0).astype(jnp.float32)
            elif dw == 1:
                m = m * (w_pos != W - 1).astype(jnp.float32)
            rows.append(m)
    mask = jnp.stack(rows)                                      # (9, HW)
    return jnp.broadcast_to(mask[:, None, :], (9, CP, HW))


def _pick_batch_tile(B, CP, HW):
    """>=2 grid steps (both v7x TCs get work); cap col scratch at ~8 MiB."""
    max_bt = max(1, (8 * 1024 * 1024) // (9 * CP * HW * 4))
    bt = max(1, min(max(1, B // 2), max_bt))
    while B % bt:
        bt -= 1
    return bt


@jax.jit
def concat_forward(x1_nchw, x2_nchw, w1, b1, w2, b2):
    """Concat.forward: x1, x2 (B, C, H, W) NCHW f32; conv weights in PyTorch OIHW."""
    B, C, H, W = x1_nchw.shape
    HW = H * W
    CP = ((C + 7) // 8) * 8                                     # sublane-aligned channels
    Bt = _pick_batch_tile(B, CP, HW)

    # Cheap channel pad only (no transpose / concat / spatial pad in HBM).
    x1f = jnp.pad(x1_nchw.reshape(B, C, HW), ((0, 0), (0, CP - C), (0, 0)))
    x2f = jnp.pad(x2_nchw.reshape(B, C, HW), ((0, 0), (0, CP - C), (0, 0)))

    w1a = _conv_weight_to_mat(w1[:, :C], CP, CP)                 # (CP, 9*CP)
    w1b = _conv_weight_to_mat(w1[:, C:], CP, CP)                 # (CP, 9*CP)
    w2m = _conv_weight_to_mat(w2, CP, CP)                        # (CP, 9*CP)
    b1p = jnp.pad(b1, (0, CP - C)).reshape(CP, 1)
    b2p = jnp.pad(b2, (0, CP - C)).reshape(CP, 1)
    masks = _edge_masks(H, W, CP)                                # (9, CP, HW)

    kernel = functools.partial(_concat_conv_kernel, H=H, W=W)

    out_flat = pl.pallas_call(
        kernel,
        out_shape=jax.ShapeDtypeStruct((B, C, HW), x1_nchw.dtype),
        grid=(B // Bt,),
        in_specs=[
            pl.BlockSpec((Bt, CP, HW), lambda i: (i, 0, 0)),
            pl.BlockSpec((Bt, CP, HW), lambda i: (i, 0, 0)),
            pl.BlockSpec((9, CP, HW), lambda i: (0, 0, 0)),
            pl.BlockSpec((CP, 9 * CP), lambda i: (0, 0)),
            pl.BlockSpec((CP, 9 * CP), lambda i: (0, 0)),
            pl.BlockSpec((CP, 1), lambda i: (0, 0)),
            pl.BlockSpec((CP, 9 * CP), lambda i: (0, 0)),
            pl.BlockSpec((CP, 1), lambda i: (0, 0)),
        ],
        out_specs=pl.BlockSpec((Bt, C, HW), lambda i: (i, 0, 0)),
        scratch_shapes=[pltpu.VMEM((9 * CP, Bt * HW), jnp.float32)],
        compiler_params=pltpu.CompilerParams(dimension_semantics=("parallel",)),
    )(x1f, x2f, masks, w1a, w1b, b1p, w2m, b2p)

    return out_flat.reshape(B, C, H, W)


def _reference_forward(x1, x2, w1, b1, w2, b2):
    """Pure-JAX reference (NCHW / OIHW), matches the PyTorch Concat module."""
    dn = ("NCHW", "OIHW", "NCHW")
    xc = jnp.concatenate([x1, x2], axis=1)
    y = lax.conv_general_dilated(xc, w1, (1, 1), "SAME", dimension_numbers=dn)
    y = y + b1[None, :, None, None]
    y = jnp.where(y > 0, y, LEAKY_SLOPE * y)
    z = lax.conv_general_dilated(y, w2, (1, 1), "SAME", dimension_numbers=dn)
    z = z + b2[None, :, None, None]
    z = jnp.where(z > 0, z, LEAKY_SLOPE * z)
    return z


if __name__ == "__main__":
    B, C, H, W = 2, 4, 16, 16
    key = jax.random.PRNGKey(0)
    k1, k2, k3, k4, k5, k6 = jax.random.split(key, 6)

    x1 = jax.random.normal(k1, (B, C, H, W), dtype=jnp.float32)
    x2 = jax.random.normal(k2, (B, C, H, W), dtype=jnp.float32)

    # Parameters with PyTorch shapes: Conv2d(2C->C, 3x3) and Conv2d(C->C, 3x3), OIHW.
    w1 = 0.1 * jax.random.normal(k3, (C, 2 * C, 3, 3), dtype=jnp.float32)
    b1 = 0.1 * jax.random.normal(k4, (C,), dtype=jnp.float32)
    w2 = 0.1 * jax.random.normal(k5, (C, C, 3, 3), dtype=jnp.float32)
    b2 = 0.1 * jax.random.normal(k6, (C,), dtype=jnp.float32)

    out = jax.block_until_ready(concat_forward(x1, x2, w1, b1, w2, b2))
    ref = jax.block_until_ready(_reference_forward(x1, x2, w1, b1, w2, b2))

    assert out.shape == (B, C, H, W)
    err = jnp.max(jnp.abs(out - ref))
    assert jnp.allclose(out, ref, atol=1e-4, rtol=1e-4), f"max abs err {err}"
    print("KERNEL_OK")
</pallas_src>

<mosaic_0001>
module attributes {stable_mosaic.version = 11 : i64} {
  func.func @_concat_conv_kernel(%arg0: i32, %arg1: memref<1x8x256xf32, #tpu.memory_space<vmem>>, %arg2: memref<1x8x256xf32, #tpu.memory_space<vmem>>, %arg3: memref<9x8x256xf32, #tpu.memory_space<vmem>>, %arg4: memref<8x72xf32, #tpu.memory_space<vmem>>, %arg5: memref<8x72xf32, #tpu.memory_space<vmem>>, %arg6: memref<8x1xf32, #tpu.memory_space<vmem>>, %arg7: memref<8x72xf32, #tpu.memory_space<vmem>>, %arg8: memref<8x1xf32, #tpu.memory_space<vmem>>, %arg9: memref<1x4x256xf32, #tpu.memory_space<vmem>>, %arg10: memref<72x256xf32, #tpu.memory_space<vmem>>) attributes {dimension_semantics = [#tpu.dimension_semantics<parallel>], iteration_bounds = array<i64: 2>, scalar_prefetch = 0 : i64, scratch_operands = 1 : i64, tpu.core_type = #tpu.core_type<tc>, window_params = [{transform_indices = @transform_0, window_bounds = array<i64: 1, 8, 256>}, {transform_indices = @transform_1, window_bounds = array<i64: 1, 8, 256>}, {pipeline_mode = #tpu.pipeline_mode<synchronous>, transform_indices = @transform_2, window_bounds = array<i64: 9, 8, 256>}, {pipeline_mode = #tpu.pipeline_mode<synchronous>, transform_indices = @transform_3, window_bounds = array<i64: 8, 72>}, {pipeline_mode = #tpu.pipeline_mode<synchronous>, transform_indices = @transform_4, window_bounds = array<i64: 8, 72>}, {pipeline_mode = #tpu.pipeline_mode<synchronous>, transform_indices = @transform_5, window_bounds = array<i64: 8, 1>}, {pipeline_mode = #tpu.pipeline_mode<synchronous>, transform_indices = @transform_6, window_bounds = array<i64: 8, 72>}, {pipeline_mode = #tpu.pipeline_mode<synchronous>, transform_indices = @transform_7, window_bounds = array<i64: 8, 1>}, {transform_indices = @transform_8, window_bounds = array<i64: 1, 4, 256>}]} {
    %c0 = arith.constant 0 : index
    %c0_0 = arith.constant 0 : index
    %c0_1 = arith.constant 0 : index
    %0 = vector.load %arg1[%c0, %c0_0, %c0_1] : memref<1x8x256xf32, #tpu.memory_space<vmem>>, vector<1x8x256xf32>
    %1 = vector.shape_cast %0 : vector<1x8x256xf32> to vector<8x256xf32>
    %c17_i32 = arith.constant 17 : i32
    %2 = tpu.dynamic_rotate %1 by %c17_i32 dim 1 : vector<8x256xf32>, i32 -> vector<8x256xf32>
    %c0_2 = arith.constant 0 : index
    %c0_3 = arith.constant 0 : index
    %c0_4 = arith.constant 0 : index
    %3 = vector.load %arg3[%c0_2, %c0_3, %c0_4] : memref<9x8x256xf32, #tpu.memory_space<vmem>>, vector<1x8x256xf32>
    %4 = vector.shape_cast %3 : vector<1x8x256xf32> to vector<8x256xf32>
    %5 = arith.mulf %2, %4 : vector<8x256xf32>
    %c0_5 = arith.constant 0 : index
    %c0_6 = arith.constant 0 : index
    %6 = vector.load %arg10[%c0_5, %c0_6] : memref<72x256xf32, #tpu.memory_space<vmem>>, vector<8x256xf32>
    tpu.vector_store %arg10[%c0_5, %c0_6], %5 {strides = array<i32>} : memref<72x256xf32, #tpu.memory_space<vmem>>, vector<8x256xf32>,
    %c16_i32 = arith.constant 16 : i32
    %7 = tpu.dynamic_rotate %1 by %c16_i32 dim 1 : vector<8x256xf32>, i32 -> vector<8x256xf32>
    %c1 = arith.constant 1 : index
    %c0_7 = arith.constant 0 : index
    %c0_8 = arith.constant 0 : index
    %8 = vector.load %arg3[%c1, %c0_7, %c0_8] : memref<9x8x256xf32, #tpu.memory_space<vmem>>, vector<1x8x256xf32>
    %9 = vector.shape_cast %8 : vector<1x8x256xf32> to vector<8x256xf32>
    %10 = arith.mulf %7, %9 : vector<8x256xf32>
    %c8 = arith.constant 8 : index
    %c0_9 = arith.constant 0 : index
    %11 = vector.load %arg10[%c8, %c0_9] : memref<72x256xf32, #tpu.memory_space<vmem>>, vector<8x256xf32>
    tpu.vector_store %arg10[%c8, %c0_9], %10 {strides = array<i32>} : memref<72x256xf32, #tpu.memory_space<vmem>>, vector<8x256xf32>,
    %c15_i32 = arith.constant 15 : i32
    %12 = tpu.dynamic_rotate %1 by %c15_i32 dim 1 : vector<8x256xf32>, i32 -> vector<8x256xf32>
    %c2 = arith.constant 2 : index
    %c0_10 = arith.constant 0 : index
    %c0_11 = arith.constant 0 : index
    %13 = vector.load %arg3[%c2, %c0_10, %c0_11] : memref<9x8x256xf32, #tpu.memory_space<vmem>>, vector<1x8x256xf32>
    %14 = vector.shape_cast %13 : vector<1x8x256xf32> to vector<8x256xf32>
    %15 = arith.mulf %12, %14 : vector<8x256xf32>
    %c16 = arith.constant 16 : index
    %c0_12 = arith.constant 0 : index
    %16 = vector.load %arg10[%c16, %c0_12] : memref<72x256xf32, #tpu.memory_space<vmem>>, vector<8x256xf32>
    tpu.vector_store %arg10[%c16, %c0_12], %15 {strides = array<i32>} : memref<72x256xf32, #tpu.memory_space<vmem>>, vector<8x256xf32>,
    %c1_i32 = arith.constant 1 : i32
    %17 = tpu.dynamic_rotate %1 by %c1_i32 dim 1 : vector<8x256xf32>, i32 -> vector<8x256xf32>
    %c3 = arith.constant 3 : index
    %c0_13 = arith.constant 0 : index
    %c0_14 = arith.constant 0 : index
    %18 = vector.load %arg3[%c3, %c0_13, %c0_14] : memref<9x8x256xf32, #tpu.memory_space<vmem>>, vector<1x8x256xf32>
    %19 = vector.shape_cast %18 : vector<1x8x256xf32> to vector<8x256xf32>
    %20 = arith.mulf %17, %19 : vector<8x256xf32>
    %c24 = arith.constant 24 : index
    %c0_15 = arith.constant 0 : index
    %21 = vector.load %arg10[%c24, %c0_15] : memref<72x256xf32, #tpu.memory_space<vmem>>, vector<8x256xf32>
    tpu.vector_store %arg10[%c24, %c0_15], %20 {strides = array<i32>} : memref<72x256xf32, #tpu.memory_space<vmem>>, vector<8x256xf32>,
    %c4 = arith.constant 4 : index
    %c0_16 = arith.constant 0 : index
    %c0_17 = arith.constant 0 : index
    %22 = vector.load %arg3[%c4, %c0_16, %c0_17] : memref<9x8x256xf32, #tpu.memory_space<vmem>>, vector<1x8x256xf32>
    %23 = vector.shape_cast %22 : vector<1x8x256xf32> to vector<8x256xf32>
    %24 = arith.mulf %1, %23 : vector<8x256xf32>
    %c32 = arith.constant 32 : index
    %c0_18 = arith.constant 0 : index
    %25 = vector.load %arg10[%c32, %c0_18] : memref<72x256xf32, #tpu.memory_space<vmem>>, vector<8x256xf32>
    tpu.vector_store %arg10[%c32, %c0_18], %24 {strides = array<i32>} : memref<72x256xf32, #tpu.memory_space<vmem>>, vector<8x256xf32>,
    %c255_i32 = arith.constant 255 : i32
    %26 = tpu.dynamic_rotate %1 by %c255_i32 dim 1 : vector<8x256xf32>, i32 -> vector<8x256xf32>
    %c5 = arith.constant 5 : index
    %c0_19 = arith.constant 0 : index
    %c0_20 = arith.constant 0 : index
    %27 = vector.load %arg3[%c5, %c0_19, %c0_20] : memref<9x8x256xf32, #tpu.memory_space<vmem>>, vector<1x8x256xf32>
    %28 = vector.shape_cast %27 : vector<1x8x256xf32> to vector<8x256xf32>
    %29 = arith.mulf %26, %28 : vector<8x256xf32>
    %c40 = arith.constant 40 : index
    %c0_21 = arith.constant 0 : index
    %30 = vector.load %arg10[%c40, %c0_21] : memref<72x256xf32, #tpu.memory_space<vmem>>, vector<8x256xf32>
    tpu.vector_store %arg10[%c40, %c0_21], %29 {strides = array<i32>} : memref<72x256xf32, #tpu.memory_space<vmem>>, vector<8x256xf32>,
    %c241_i32 = arith.constant 241 : i32
    %31 = tpu.dynamic_rotate %1 by %c241_i32 dim 1 : vector<8x256xf32>, i32 -> vector<8x256xf32>
    %c6 = arith.constant 6 : index
    %c0_22 = arith.constant 0 : index
    %c0_23 = arith.constant 0 : index
    %32 = vector.load %arg3[%c6, %c0_22, %c0_23] : memref<9x8x256xf32, #tpu.memory_space<vmem>>, vector<1x8x256xf32>
    %33 = vector.shape_cast %32 : vector<1x8x256xf32> to vector<8x256xf32>
    %34 = arith.mulf %31, %33 : vector<8x256xf32>
    %c48 = arith.constant 48 : index
    %c0_24 = arith.constant 0 : index
    %35 = vector.load %arg10[%c48, %c0_24] : memref<72x256xf32, #tpu.memory_space<vmem>>, vector<8x256xf32>
    tpu.vector_store %arg10[%c48, %c0_24], %34 {strides = array<i32>} : memref<72x256xf32, #tpu.memory_space<vmem>>, vector<8x256xf32>,
    %c240_i32 = arith.constant 240 : i32
    %36 = tpu.dynamic_rotate %1 by %c240_i32 dim 1 : vector<8x256xf32>, i32 -> vector<8x256xf32>
    %c7 = arith.constant 7 : index
    %c0_25 = arith.constant 0 : index
    %c0_26 = arith.constant 0 : index
    %37 = vector.load %arg3[%c7, %c0_25, %c0_26] : memref<9x8x256xf32, #tpu.memory_space<vmem>>, vector<1x8x256xf32>
    %38 = vector.shape_cast %37 : vector<1x8x256xf32> to vector<8x256xf32>
    %39 = arith.mulf %36, %38 : vector<8x256xf32>
    %c56 = arith.constant 56 : index
    %c0_27 = arith.constant 0 : index
    %40 = vector.load %arg10[%c56, %c0_27] : memref<72x256xf32, #tpu.memory_space<vmem>>, vector<8x256xf32>
    tpu.vector_store %arg10[%c56, %c0_27], %39 {strides = array<i32>} : memref<72x256xf32, #tpu.memory_space<vmem>>, vector<8x256xf32>,
    %c239_i32 = arith.constant 239 : i32
    %41 = tpu.dynamic_rotate %1 by %c239_i32 dim 1 : vector<8x256xf32>, i32 -> vector<8x256xf32>
    %c8_28 = arith.constant 8 : index
    %c0_29 = arith.constant 0 : index
    %c0_30 = arith.constant 0 : index
    %42 = vector.load %arg3[%c8_28, %c0_29, %c0_30] : memref<9x8x256xf32, #tpu.memory_space<vmem>>, vector<1x8x256xf32>
    %43 = vector.shape_cast %42 : vector<1x8x256xf32> to vector<8x256xf32>
    %44 = arith.mulf %41, %43 : vector<8x256xf32>
    %c64 = arith.constant 64 : index
    %c0_31 = arith.constant 0 : index
    %45 = vector.load %arg10[%c64, %c0_31] : memref<72x256xf32, #tpu.memory_space<vmem>>, vector<8x256xf32>
    tpu.vector_store %arg10[%c64, %c0_31], %44 {strides = array<i32>} : memref<72x256xf32, #tpu.memory_space<vmem>>, vector<8x256xf32>,
    %c0_32 = arith.constant 0 : index
    %c0_33 = arith.constant 0 : index
    %46 = vector.load %arg4[%c0_32, %c0_33] : memref<8x72xf32, #tpu.memory_space<vmem>>, vector<8x72xf32>
    %c0_34 = arith.constant 0 : index
    %c0_35 = arith.constant 0 : index
    %47 = vector.load %arg10[%c0_34, %c0_35] : memref<72x256xf32, #tpu.memory_space<vmem>>, vector<72x256xf32>
    %cst = arith.constant dense<0.000000e+00> : vector<8x256xf32>
    %48 = tpu.matmul %46, %47, %cst {dimension_numbers = #tpu.dot_dimension_numbers<[1], [0], [0], [1], [0, 0, 1, 1], [], []>} : vector<8x72xf32>, vector<72x256xf32>, vector<8x256xf32> -> vector<8x256xf32>
    %c0_36 = arith.constant 0 : index
    %c0_37 = arith.constant 0 : index
    %c0_38 = arith.constant 0 : index
    %49 = vector.load %arg2[%c0_36, %c0_37, %c0_38] : memref<1x8x256xf32, #tpu.memory_space<vmem>>, vector<1x8x256xf32>
    %50 = vector.shape_cast %49 : vector<1x8x256xf32> to vector<8x256xf32>
    %c17_i32_39 = arith.constant 17 : i32
    %51 = tpu.dynamic_rotate %50 by %c17_i32_39 dim 1 : vector<8x256xf32>, i32 -> vector<8x256xf32>
    %c0_40 = arith.constant 0 : index
    %c0_41 = arith.constant 0 : index
    %c0_42 = arith.constant 0 : index
    %52 = vector.load %arg3[%c0_40, %c0_41, %c0_42] : memref<9x8x256xf32, #tpu.memory_space<vmem>>, vector<1x8x256xf32>
    %53 = vector.shape_cast %52 : vector<1x8x256xf32> to vector<8x256xf32>
    %54 = arith.mulf %51, %53 : vector<8x256xf32>
    %c0_43 = arith.constant 0 : index
    %c0_44 = arith.constant 0 : index
    %55 = vector.load %arg10[%c0_43, %c0_44] : memref<72x256xf32, #tpu.memory_space<vmem>>, vector<8x256xf32>
    tpu.vector_store %arg10[%c0_43, %c0_44], %54 {strides = array<i32>} : memref<72x256xf32, #tpu.memory_space<vmem>>, vector<8x256xf32>,
    %c16_i32_45 = arith.constant 16 : i32
    %56 = tpu.dynamic_rotate %50 by %c16_i32_45 dim 1 : vector<8x256xf32>, i32 -> vector<8x256xf32>
    %c1_46 = arith.constant 1 : index
    %c0_47 = arith.constant 0 : index
    %c0_48 = arith.constant 0 : index
    %57 = vector.load %arg3[%c1_46, %c0_47, %c0_48] : memref<9x8x256xf32, #tpu.memory_space<vmem>>, vector<1x8x256xf32>
    %58 = vector.shape_cast %57 : vector<1x8x256xf32> to vector<8x256xf32>
    %59 = arith.mulf %56, %58 : vector<8x256xf32>
    %c8_49 = arith.constant 8 : index
    %c0_50 = arith.constant 0 : index
    %60 = vector.load %arg10[%c8_49, %c0_50] : memref<72x256xf32, #tpu.memory_space<vmem>>, vector<8x256xf32>
    tpu.vector_store %arg10[%c8_49, %c0_50], %59 {strides = array<i32>} : memref<72x256xf32, #tpu.memory_space<vmem>>, vector<8x256xf32>,
    %c15_i32_51 = arith.constant 15 : i32
    %61 = tpu.dynamic_rotate %50 by %c15_i32_51 dim 1 : vector<8x256xf32>, i32 -> vector<8x256xf32>
    %c2_52 = arith.constant 2 : index
    %c0_53 = arith.constant 0 : index
    %c0_54 = arith.constant 0 : index
    %62 = vector.load %arg3[%c2_52, %c0_53, %c0_54] : memref<9x8x256xf32, #tpu.memory_space<vmem>>, vector<1x8x256xf32>
    %63 = vector.shape_cast %62 : vector<1x8x256xf32> to vector<8x256xf32>
    %64 = arith.mulf %61, %63 : vector<8x256xf32>
    %c16_55 = arith.constant 16 : index
    %c0_56 = arith.constant 0 : index
    %65 = vector.load %arg10[%c16_55, %c0_56] : memref<72x256xf32, #tpu.memory_space<vmem>>, vector<8x256xf32>
    tpu.vector_store %arg10[%c16_55, %c0_56], %64 {strides = array<i32>} : memref<72x256xf32, #tpu.memory_space<vmem>>, vector<8x256xf32>,
    %c1_i32_57 = arith.constant 1 : i32
    %66 = tpu.dynamic_rotate %50 by %c1_i32_57 dim 1 : vector<8x256xf32>, i32 -> vector<8x256xf32>
    %c3_58 = arith.constant 3 : index
    %c0_59 = arith.constant 0 : index
    %c0_60 = arith.constant 0 : index
    %67 = vector.load %arg3[%c3_58, %c0_59, %c0_60] : memref<9x8x256xf32, #tpu.memory_space<vmem>>, vector<1x8x256xf32>
    %68 = vector.shape_cast %67 : vector<1x8x256xf32> to vector<8x256xf32>
    %69 = arith.mulf %66, %68 : vector<8x256xf32>
    %c24_61 = arith.constant 24 : index
    %c0_62 = arith.constant 0 : index
    %70 = vector.load %arg10[%c24_61, %c0_62] : memref<72x256xf32, #tpu.memory_space<vmem>>, vector<8x256xf32>
    tpu.vector_store %arg10[%c24_61, %c0_62], %69 {strides = array<i32>} : memref<72x256xf32, #tpu.memory_space<vmem>>, vector<8x256xf32>,
    %c4_63 = arith.constant 4 : index
    %c0_64 = arith.constant 0 : index
    %c0_65 = arith.constant 0 : index
    %71 = vector.load %arg3[%c4_63, %c0_64, %c0_65] : memref<9x8x256xf32, #tpu.memory_space<vmem>>, vector<1x8x256xf32>
    %72 = vector.shape_cast %71 : vector<1x8x256xf32> to vector<8x256xf32>
    %73 = arith.mulf %50, %72 : vector<8x256xf32>
    %c32_66 = arith.constant 32 : index
    %c0_67 = arith.constant 0 : index
    %74 = vector.load %arg10[%c32_66, %c0_67] : memref<72x256xf32, #tpu.memory_space<vmem>>, vector<8x256xf32>
    tpu.vector_store %arg10[%c32_66, %c0_67], %73 {strides = array<i32>} : memref<72x256xf32, #tpu.memory_space<vmem>>, vector<8x256xf32>,
    %c255_i32_68 = arith.constant 255 : i32
    %75 = tpu.dynamic_rotate %50 by %c255_i32_68 dim 1 : vector<8x256xf32>, i32 -> vector<8x256xf32>
    %c5_69 = arith.constant 5 : index
    %c0_70 = arith.constant 0 : index
    %c0_71 = arith.constant 0 : index
    %76 = vector.load %arg3[%c5_69, %c0_70, %c0_71] : memref<9x8x256xf32, #tpu.memory_space<vmem>>, vector<1x8x256xf32>
    %77 = vector.shape_cast %76 : vector<1x8x256xf32> to vector<8x256xf32>
    %78 = arith.mulf %75, %77 : vector<8x256xf32>
    %c40_72 = arith.constant 40 : index
    %c0_73 = arith.constant 0 : index
    %79 = vector.load %arg10[%c40_72, %c0_73] : memref<72x256xf32, #tpu.memory_space<vmem>>, vector<8x256xf32>
    tpu.vector_store %arg10[%c40_72, %c0_73], %78 {strides = array<i32>} : memref<72x256xf32, #tpu.memory_space<vmem>>, vector<8x256xf32>,
    %c241_i32_74 = arith.constant 241 : i32
    %80 = tpu.dynamic_rotate %50 by %c241_i32_74 dim 1 : vector<8x256xf32>, i32 -> vector<8x256xf32>
    %c6_75 = arith.constant 6 : index
    %c0_76 = arith.constant 0 : index
    %c0_77 = arith.constant 0 : index
    %81 = vector.load %arg3[%c6_75, %c0_76, %c0_77] : memref<9x8x256xf32, #tpu.memory_space<vmem>>, vector<1x8x256xf32>
    %82 = vector.shape_cast %81 : vector<1x8x256xf32> to vector<8x256xf32>
    %83 = arith.mulf %80, %82 : vector<8x256xf32>
    %c48_78 = arith.constant 48 : index
    %c0_79 = arith.constant 0 : index
    %84 = vector.load %arg10[%c48_78, %c0_79] : memref<72x256xf32, #tpu.memory_space<vmem>>, vector<8x256xf32>
    tpu.vector_store %arg10[%c48_78, %c0_79], %83 {strides = array<i32>} : memref<72x256xf32, #tpu.memory_space<vmem>>, vector<8x256xf32>,
    %c240_i32_80 = arith.constant 240 : i32
    %85 = tpu.dynamic_rotate %50 by %c240_i32_80 dim 1 : vector<8x256xf32>, i32 -> vector<8x256xf32>
    %c7_81 = arith.constant 7 : index
    %c0_82 = arith.constant 0 : index
    %c0_83 = arith.constant 0 : index
    %86 = vector.load %arg3[%c7_81, %c0_82, %c0_83] : memref<9x8x256xf32, #tpu.memory_space<vmem>>, vector<1x8x256xf32>
    %87 = vector.shape_cast %86 : vector<1x8x256xf32> to vector<8x256xf32>
    %88 = arith.mulf %85, %87 : vector<8x256xf32>
    %c56_84 = arith.constant 56 : index
    %c0_85 = arith.constant 0 : index
    %89 = vector.load %arg10[%c56_84, %c0_85] : memref<72x256xf32, #tpu.memory_space<vmem>>, vector<8x256xf32>
    tpu.vector_store %arg10[%c56_84, %c0_85], %88 {strides = array<i32>} : memref<72x256xf32, #tpu.memory_space<vmem>>, vector<8x256xf32>,
    %c239_i32_86 = arith.constant 239 : i32
    %90 = tpu.dynamic_rotate %50 by %c239_i32_86 dim 1 : vector<8x256xf32>, i32 -> vector<8x256xf32>
    %c8_87 = arith.constant 8 : index
    %c0_88 = arith.constant 0 : index
    %c0_89 = arith.constant 0 : index
    %91 = vector.load %arg3[%c8_87, %c0_88, %c0_89] : memref<9x8x256xf32, #tpu.memory_space<vmem>>, vector<1x8x256xf32>
    %92 = vector.shape_cast %91 : vector<1x8x256xf32> to vector<8x256xf32>
    %93 = arith.mulf %90, %92 : vector<8x256xf32>
    %c64_90 = arith.constant 64 : index
    %c0_91 = arith.constant 0 : index
    %94 = vector.load %arg10[%c64_90, %c0_91] : memref<72x256xf32, #tpu.memory_space<vmem>>, vector<8x256xf32>
    tpu.vector_store %arg10[%c64_90, %c0_91], %93 {strides = array<i32>} : memref<72x256xf32, #tpu.memory_space<vmem>>, vector<8x256xf32>,
    %c0_92 = arith.constant 0 : index
    %c0_93 = arith.constant 0 : index
    %95 = vector.load %arg5[%c0_92, %c0_93] : memref<8x72xf32, #tpu.memory_space<vmem>>, vector<8x72xf32>
    %c0_94 = arith.constant 0 : index
    %c0_95 = arith.constant 0 : index
    %96 = vector.load %arg10[%c0_94, %c0_95] : memref<72x256xf32, #tpu.memory_space<vmem>>, vector<72x256xf32>
    %cst_96 = arith.constant dense<0.000000e+00> : vector<8x256xf32>
    %97 = tpu.matmul %95, %96, %cst_96 {dimension_numbers = #tpu.dot_dimension_numbers<[1], [0], [0], [1], [0, 0, 1, 1], [], []>} : vector<8x72xf32>, vector<72x256xf32>, vector<8x256xf32> -> vector<8x256xf32>
    %98 = arith.addf %48, %97 : vector<8x256xf32>
    %c0_97 = arith.constant 0 : index
    %c0_98 = arith.constant 0 : index
    %99 = vector.load %arg6[%c0_97, %c0_98] : memref<8x1xf32, #tpu.memory_space<vmem>>, vector<8x1xf32>
    %100 = vector.broadcast %99 : vector<8x1xf32> to vector<8x256xf32>
    %101 = arith.addf %98, %100 : vector<8x256xf32>
    %cst_99 = arith.constant 0.000000e+00 : f32
    %102 = vector.broadcast %cst_99 : f32 to vector<8x256xf32>
    %103 = arith.cmpf ogt, %101, %102 : vector<8x256xf32>
    %cst_100 = arith.constant 0.00999999977 : f32
    %104 = vector.broadcast %cst_100 : f32 to vector<8x256xf32>
    %105 = arith.mulf %104, %101 : vector<8x256xf32>
    %106 = arith.select %103, %101, %105 : vector<8x256xi1>, vector<8x256xf32>
    %c17_i32_101 = arith.constant 17 : i32
    %107 = tpu.dynamic_rotate %106 by %c17_i32_101 dim 1 : vector<8x256xf32>, i32 -> vector<8x256xf32>
    %c0_102 = arith.constant 0 : index
    %c0_103 = arith.constant 0 : index
    %c0_104 = arith.constant 0 : index
    %108 = vector.load %arg3[%c0_102, %c0_103, %c0_104] : memref<9x8x256xf32, #tpu.memory_space<vmem>>, vector<1x8x256xf32>
    %109 = vector.shape_cast %108 : vector<1x8x256xf32> to vector<8x256xf32>
    %110 = arith.mulf %107, %109 : vector<8x256xf32>
    %c0_105 = arith.constant 0 : index
    %c0_106 = arith.constant 0 : index
    %111 = vector.load %arg10[%c0_105, %c0_106] : memref<72x256xf32, #tpu.memory_space<vmem>>, vector<8x256xf32>
    tpu.vector_store %arg10[%c0_105, %c0_106], %110 {strides = array<i32>} : memref<72x256xf32, #tpu.memory_space<vmem>>, vector<8x256xf32>,
    %c16_i32_107 = arith.constant 16 : i32
    %112 = tpu.dynamic_rotate %106 by %c16_i32_107 dim 1 : vector<8x256xf32>, i32 -> vector<8x256xf32>
    %c1_108 = arith.constant 1 : index
    %c0_109 = arith.constant 0 : index
    %c0_110 = arith.constant 0 : index
    %113 = vector.load %arg3[%c1_108, %c0_109, %c0_110] : memref<9x8x256xf32, #tpu.memory_space<vmem>>, vector<1x8x256xf32>
    %114 = vector.shape_cast %113 : vector<1x8x256xf32> to vector<8x256xf32>
    %115 = arith.mulf %112, %114 : vector<8x256xf32>
    %c8_111 = arith.constant 8 : index
    %c0_112 = arith.constant 0 : index
    %116 = vector.load %arg10[%c8_111, %c0_112] : memref<72x256xf32, #tpu.memory_space<vmem>>, vector<8x256xf32>
    tpu.vector_store %arg10[%c8_111, %c0_112], %115 {strides = array<i32>} : memref<72x256xf32, #tpu.memory_space<vmem>>, vector<8x256xf32>,
    %c15_i32_113 = arith.constant 15 : i32
    %117 = tpu.dynamic_rotate %106 by %c15_i32_113 dim 1 : vector<8x256xf32>, i32 -> vector<8x256xf32>
    %c2_114 = arith.constant 2 : index
    %c0_115 = arith.constant 0 : index
    %c0_116 = arith.constant 0 : index
    %118 = vector.load %arg3[%c2_114, %c0_115, %c0_116] : memref<9x8x256xf32, #tpu.memory_space<vmem>>, vector<1x8x256xf32>
    %119 = vector.shape_cast %118 : vector<1x8x256xf32> to vector<8x256xf32>
    %120 = arith.mulf %117, %119 : vector<8x256xf32>
    %c16_117 = arith.constant 16 : index
    %c0_118 = arith.constant 0 : index
    %121 = vector.load %arg10[%c16_117, %c0_118] : memref<72x256xf32, #tpu.memory_space<vmem>>, vector<8x256xf32>
    tpu.vector_store %arg10[%c16_117, %c0_118], %120 {strides = array<i32>} : memref<72x256xf32, #tpu.memory_space<vmem>>, vector<8x256xf32>,
    %c1_i32_119 = arith.constant 1 : i32
    %122 = tpu.dynamic_rotate %106 by %c1_i32_119 dim 1 : vector<8x256xf32>, i32 -> vector<8x256xf32>
    %c3_120 = arith.constant 3 : index
    %c0_121 = arith.constant 0 : index
    %c0_122 = arith.constant 0 : index
    %123 = vector.load %arg3[%c3_120, %c0_121, %c0_122] : memref<9x8x256xf32, #tpu.memory_space<vmem>>, vector<1x8x256xf32>
    %124 = vector.shape_cast %123 : vector<1x8x256xf32> to vector<8x256xf32>
    %125 = arith.mulf %122, %124 : vector<8x256xf32>
    %c24_123 = arith.constant 24 : index
    %c0_124 = arith.constant 0 : index
    %126 = vector.load %arg10[%c24_123, %c0_124] : memref<72x256xf32, #tpu.memory_space<vmem>>, vector<8x256xf32>
    tpu.vector_store %arg10[%c24_123, %c0_124], %125 {strides = array<i32>} : memref<72x256xf32, #tpu.memory_space<vmem>>, vector<8x256xf32>,
    %c4_125 = arith.constant 4 : index
    %c0_126 = arith.constant 0 : index
    %c0_127 = arith.constant 0 : index
    %127 = vector.load %arg3[%c4_125, %c0_126, %c0_127] : memref<9x8x256xf32, #tpu.memory_space<vmem>>, vector<1x8x256xf32>
    %128 = vector.shape_cast %127 : vector<1x8x256xf32> to vector<8x256xf32>
    %129 = arith.mulf %106, %128 : vector<8x256xf32>
    %c32_128 = arith.constant 32 : index
    %c0_129 = arith.constant 0 : index
    %130 = vector.load %arg10[%c32_128, %c0_129] : memref<72x256xf32, #tpu.memory_space<vmem>>, vector<8x256xf32>
    tpu.vector_store %arg10[%c32_128, %c0_129], %129 {strides = array<i32>} : memref<72x256xf32, #tpu.memory_space<vmem>>, vector<8x256xf32>,
    %c255_i32_130 = arith.constant 255 : i32
    %131 = tpu.dynamic_rotate %106 by %c255_i32_130 dim 1 : vector<8x256xf32>, i32 -> vector<8x256xf32>
    %c5_131 = arith.constant 5 : index
    %c0_132 = arith.constant 0 : index
    %c0_133 = arith.constant 0 : index
    %132 = vector.load %arg3[%c5_131, %c0_132, %c0_133] : memref<9x8x256xf32, #tpu.memory_space<vmem>>, vector<1x8x256xf32>
    %133 = vector.shape_cast %132 : vector<1x8x256xf32> to vector<8x256xf32>
    %134 = arith.mulf %131, %133 : vector<8x256xf32>
    %c40_134 = arith.constant 40 : index
    %c0_135 = arith.constant 0 : index
    %135 = vector.load %arg10[%c40_134, %c0_135] : memref<72x256xf32, #tpu.memory_space<vmem>>, vector<8x256xf32>
    tpu.vector_store %arg10[%c40_134, %c0_135], %134 {strides = array<i32>} : memref<72x256xf32, #tpu.memory_space<vmem>>, vector<8x256xf32>,
    %c241_i32_136 = arith.constant 241 : i32
    %136 = tpu.dynamic_rotate %106 by %c241_i32_136 dim 1 : vector<8x256xf32>, i32 -> vector<8x256xf32>
    %c6_137 = arith.constant 6 : index
    %c0_138 = arith.constant 0 : index
    %c0_139 = arith.constant 0 : index
    %137 = vector.load %arg3[%c6_137, %c0_138, %c0_139] : memref<9x8x256xf32, #tpu.memory_space<vmem>>, vector<1x8x256xf32>
    %138 = vector.shape_cast %137 : vector<1x8x256xf32> to vector<8x256xf32>
    %139 = arith.mulf %136, %138 : vector<8x256xf32>
    %c48_140 = arith.constant 48 : index
    %c0_141 = arith.constant 0 : index
    %140 = vector.load %arg10[%c48_140, %c0_141] : memref<72x256xf32, #tpu.memory_space<vmem>>, vector<8x256xf32>
    tpu.vector_store %arg10[%c48_140, %c0_141], %139 {strides = array<i32>} : memref<72x256xf32, #tpu.memory_space<vmem>>, vector<8x256xf32>,
    %c240_i32_142 = arith.constant 240 : i32
    %141 = tpu.dynamic_rotate %106 by %c240_i32_142 dim 1 : vector<8x256xf32>, i32 -> vector<8x256xf32>
    %c7_143 = arith.constant 7 : index
    %c0_144 = arith.constant 0 : index
    %c0_145 = arith.constant 0 : index
    %142 = vector.load %arg3[%c7_143, %c0_144, %c0_145] : memref<9x8x256xf32, #tpu.memory_space<vmem>>, vector<1x8x256xf32>
    %143 = vector.shape_cast %142 : vector<1x8x256xf32> to vector<8x256xf32>
    %144 = arith.mulf %141, %143 : vector<8x256xf32>
    %c56_146 = arith.constant 56 : index
    %c0_147 = arith.constant 0 : index
    %145 = vector.load %arg10[%c56_146, %c0_147] : memref<72x256xf32, #tpu.memory_space<vmem>>, vector<8x256xf32>
    tpu.vector_store %arg10[%c56_146, %c0_147], %144 {strides = array<i32>} : memref<72x256xf32, #tpu.memory_space<vmem>>, vector<8x256xf32>,
    %c239_i32_148 = arith.constant 239 : i32
    %146 = tpu.dynamic_rotate %106 by %c239_i32_148 dim 1 : vector<8x256xf32>, i32 -> vector<8x256xf32>
    %c8_149 = arith.constant 8 : index
    %c0_150 = arith.constant 0 : index
    %c0_151 = arith.constant 0 : index
    %147 = vector.load %arg3[%c8_149, %c0_150, %c0_151] : memref<9x8x256xf32, #tpu.memory_space<vmem>>, vector<1x8x256xf32>
    %148 = vector.shape_cast %147 : vector<1x8x256xf32> to vector<8x256xf32>
    %149 = arith.mulf %146, %148 : vector<8x256xf32>
    %c64_152 = arith.constant 64 : index
    %c0_153 = arith.constant 0 : index
    %150 = vector.load %arg10[%c64_152, %c0_153] : memref<72x256xf32, #tpu.memory_space<vmem>>, vector<8x256xf32>
    tpu.vector_store %arg10[%c64_152, %c0_153], %149 {strides = array<i32>} : memref<72x256xf32, #tpu.memory_space<vmem>>, vector<8x256xf32>,
    %c0_154 = arith.constant 0 : index
    %c0_155 = arith.constant 0 : index
    %151 = vector.load %arg7[%c0_154, %c0_155] : memref<8x72xf32, #tpu.memory_space<vmem>>, vector<8x72xf32>
    %c0_156 = arith.constant 0 : index
    %c0_157 = arith.constant 0 : index
    %152 = vector.load %arg10[%c0_156, %c0_157] : memref<72x256xf32, #tpu.memory_space<vmem>>, vector<72x256xf32>
    %cst_158 = arith.constant dense<0.000000e+00> : vector<8x256xf32>
    %153 = tpu.matmul %151, %152, %cst_158 {dimension_numbers = #tpu.dot_dimension_numbers<[1], [0], [0], [1], [0, 0, 1, 1], [], []>} : vector<8x72xf32>, vector<72x256xf32>, vector<8x256xf32> -> vector<8x256xf32>
    %c0_159 = arith.constant 0 : index
    %c0_160 = arith.constant 0 : index
    %154 = vector.load %arg8[%c0_159, %c0_160] : memref<8x1xf32, #tpu.memory_space<vmem>>, vector<8x1xf32>
    %155 = vector.broadcast %154 : vector<8x1xf32> to vector<8x256xf32>
    %156 = arith.addf %153, %155 : vector<8x256xf32>
    %cst_161 = arith.constant 0.000000e+00 : f32
    %157 = vector.broadcast %cst_161 : f32 to vector<8x256xf32>
    %158 = arith.cmpf ogt, %156, %157 : vector<8x256xf32>
    %cst_162 = arith.constant 0.00999999977 : f32
    %159 = vector.broadcast %cst_162 : f32 to vector<8x256xf32>
    %160 = arith.mulf %159, %156 : vector<8x256xf32>
    %161 = arith.select %158, %156, %160 : vector<8x256xi1>, vector<8x256xf32>
    %162 = vector.extract_strided_slice %161 {offsets = [0, 0], sizes = [4, 256], strides = [1, 1]} : vector<8x256xf32> to vector<4x256xf32>
    %c0_163 = arith.constant 0 : index
    %c0_164 = arith.constant 0 : index
    %c0_165 = arith.constant 0 : index
    %163 = vector.load %arg9[%c0_163, %c0_164, %c0_165] : memref<1x4x256xf32, #tpu.memory_space<vmem>>, vector<1x4x256xf32>
    %164 = vector.shape_cast %163 : vector<1x4x256xf32> to vector<4x256xf32>
    %165 = vector.shape_cast %162 : vector<4x256xf32> to vector<1x4x256xf32>
    tpu.vector_store %arg9[%c0_163, %c0_164, %c0_165], %165 {strides = array<i32>} : memref<1x4x256xf32, #tpu.memory_space<vmem>>, vector<1x4x256xf32>,
    return
  }
  func.func @transform_0(%arg0: i32) -> (i32, i32, i32) {
    %c0_i32 = arith.constant 0 : i32
    %c0_i32_0 = arith.constant 0 : i32
    %c0_i32_1 = arith.constant 0 : i32
    return %arg0, %c0_i32, %c0_i32_0 : i32, i32, i32
  }
  func.func @transform_1(%arg0: i32) -> (i32, i32, i32) {
    %c0_i32 = arith.constant 0 : i32
    %c0_i32_0 = arith.constant 0 : i32
    %c0_i32_1 = arith.constant 0 : i32
    return %arg0, %c0_i32, %c0_i32_0 : i32, i32, i32
  }
  func.func @transform_2(%arg0: i32) -> (i32, i32, i32) {
    %c0_i32 = arith.constant 0 : i32
    %c0_i32_0 = arith.constant 0 : i32
    %c0_i32_1 = arith.constant 0 : i32
    %c0_i32_2 = arith.constant 0 : i32
    return %c0_i32, %c0_i32_0, %c0_i32_1 : i32, i32, i32
  }
  func.func @transform_3(%arg0: i32) -> (i32, i32) {
    %c0_i32 = arith.constant 0 : i32
    %c0_i32_0 = arith.constant 0 : i32
    %c0_i32_1 = arith.constant 0 : i32
    return %c0_i32, %c0_i32_0 : i32, i32
  }
  func.func @transform_4(%arg0: i32) -> (i32, i32) {
    %c0_i32 = arith.constant 0 : i32
    %c0_i32_0 = arith.constant 0 : i32
    %c0_i32_1 = arith.constant 0 : i32
    return %c0_i32, %c0_i32_0 : i32, i32
  }
  func.func @transform_5(%arg0: i32) -> (i32, i32) {
    %c0_i32 = arith.constant 0 : i32
    %c0_i32_0 = arith.constant 0 : i32
    %c0_i32_1 = arith.constant 0 : i32
    return %c0_i32, %c0_i32_0 : i32, i32
  }
  func.func @transform_6(%arg0: i32) -> (i32, i32) {
    %c0_i32 = arith.constant 0 : i32
    %c0_i32_0 = arith.constant 0 : i32
    %c0_i32_1 = arith.constant 0 : i32
    return %c0_i32, %c0_i32_0 : i32, i32
  }
  func.func @transform_7(%arg0: i32) -> (i32, i32) {
    %c0_i32 = arith.constant 0 : i32
    %c0_i32_0 = arith.constant 0 : i32
    %c0_i32_1 = arith.constant 0 : i32
    return %c0_i32, %c0_i32_0 : i32, i32
  }
  func.func @transform_8(%arg0: i32) -> (i32, i32, i32) {
    %c0_i32 = arith.constant 0 : i32
    %c0_i32_0 = arith.constant 0 : i32
    %c0_i32_1 = arith.constant 0 : i32
    return %arg0, %c0_i32, %c0_i32_0 : i32, i32, i32
  }
}

</mosaic_0001>

<llo_original>
// kernel: concat_forward.1
$region0: #{concat_forward.1}
  #allocation0 [shape = 'u32[]', space=smem, size = 0x4, offset = 0x4, fixed_abs, tag = 'smem constant byte address 0x4 - core index']
  #allocation1 [shape = 'u32[72,128]{1,0:T(1,128)}', space=vmem, size = 0x9000, scoped, tag = 'internal scratch']
  #allocation2 [shape = 'f32[72,256]{1,0:T(8,128)}', space=vmem, size = 0x12000, scoped, tag = 'scratch operand']
  %s0 = inlined_call_operand.vmem [shape: f32[2,8,256], index: 0, kind: input, shape index: {}]
  %s1 = inlined_call_operand.vmem [shape: f32[2,8,256], index: 1, kind: input, shape index: {}]
  %s2 = inlined_call_operand.vmem [shape: f32[9,8,256], index: 2, kind: input, shape index: {}]
  %s3 = inlined_call_operand.vmem [shape: f32[8,72], index: 3, kind: input, shape index: {}]
  %s4 = inlined_call_operand.vmem [shape: f32[8,72], index: 4, kind: input, shape index: {}]
  %s5 = inlined_call_operand.vmem [shape: f32[8,1], index: 5, kind: input, shape index: {}]
  %s6 = inlined_call_operand.vmem [shape: f32[8,72], index: 6, kind: input, shape index: {}]
  %s7 = inlined_call_operand.vmem [shape: f32[8,1], index: 7, kind: input, shape index: {}]
  %s8 = inlined_call_operand.vmem [shape: f32[2,4,256], index: 8, kind: output, shape index: {}]
  %s9 = sld [smem:[#allocation0]]
  $region65: #{concat_forward.1} parent=0
    _
  %s11 = ssub.s32 1, %s9
  %s12 = scalar_select 0, %s11, %s9
  loop: start=0, step=1, limit=4
  $region2: #{concat_forward.1} parent=0 // loop_pre_header
    _
  $region3: #{concat_forward.1} parent=0 // loop_header
    %s14 = sphi 0, %s18
    %p15 = scmp.ge.s32.totalorder %s14, 4
    %s24 = sphi 0, %s26
    %s27 = sphi 0, %s24
    %s28 = sphi 0, %s27
    %s44 = sphi 0, %s28
    %s50 = sphi 0, %s52
    %s53 = sphi 0, %s50
    %s54 = sphi 0, %s53
    %s70 = sphi 0, %s54
    %s74 = sphi 0, %s74
    %s76 = sphi 0, %s74
    %s77 = sphi 0, %s76
    %s91 = sphi 0, %s77
    %s95 = sphi 0, %s95
    %s97 = sphi 0, %s95
    %s98 = sphi 0, %s97
    %s112 = sphi 0, %s98
    %s116 = sphi 0, %s116
    %s118 = sphi 0, %s116
    %s119 = sphi 0, %s118
    %s133 = sphi 0, %s119
    %s137 = sphi 0, %s137
    %s139 = sphi 0, %s137
    %s140 = sphi 0, %s139
    %s154 = sphi 0, %s140
    %s158 = sphi 0, %s158
    %s160 = sphi 0, %s158
    %s161 = sphi 0, %s160
    %s175 = sphi 0, %s161
    %s179 = sphi 0, %s179
    %s181 = sphi 0, %s179
    %s182 = sphi 0, %s181
    %s196 = sphi 0, %s182
    %s202 = sphi 0, %s204
    %s205 = sphi 0, %s202
    %s206 = sphi 0, %s205
    %s222 = sphi 0, %s206
  $region4: #{concat_forward.1} parent=0 // loop_header_branch
    %17 = sbr.rel (%p15) target = $region8
  $region5: #{concat_forward.1} parent=0 // loop_body
    %s19 = ssub.s32 %s14, 1
    %s20 = ssub.s32 %s14, 2
    %s21 = sadd.s32 %s14, 1
    %s22 = ssub.s32 %s14, %s21
    %p23 = scmp.eq.s32.totalorder %s22, 0
    %s25 = sadd.s32 %s24, 1
    %s26 = scalar_select %p23, %s24, %s25
    %p29 = pneg %p23
    %p30 = scmp.eq.s32.totalorder %s14, 1
    %p31 = por %p29, %p30
    %p32 = scmp.ne.s32.totalorder %s24, %s27
    %p33 = scmp.eq.s32.totalorder %s14, 0
    %p34 = por %p32, %p33
    %p35 = scmp.ne.s32.totalorder %s24, %s27
    %p36 = scmp.eq.s32.totalorder %s19, 1
    %p37 = por %p35, %p36
    %p38 = scmp.ne.s32.totalorder %s27, %s28
    %p39 = scmp.eq.s32.totalorder %s19, 0
    %p40 = por %p38, %p39
    %p41 = scmp.ne.s32.totalorder %s27, %s28
    %p42 = scmp.eq.s32.totalorder %s20, 1
    %p43 = por %p41, %p42
    %p45 = scmp.ne.s32.totalorder %s28, %s44
    %p46 = scmp.eq.s32.totalorder %s20, 0
    %p47 = por %p45, %p46
    %s48 = ssub.s32 %s14, %s21
    %p49 = scmp.eq.s32.totalorder %s48, 0
    %s51 = sadd.s32 %s50, 1
    %s52 = scalar_select %p49, %s50, %s51
    %p55 = pneg %p49
    %p56 = scmp.eq.s32.totalorder %s14, 1
    %p57 = por %p55, %p56
    %p58 = scmp.ne.s32.totalorder %s50, %s53
    %p59 = scmp.eq.s32.totalorder %s14, 0
    %p60 = por %p58, %p59
    %p61 = scmp.ne.s32.totalorder %s50, %s53
    %p62 = scmp.eq.s32.totalorder %s19, 1
    %p63 = por %p61, %p62
    %p64 = scmp.ne.s32.totalorder %s53, %s54
    %p65 = scmp.eq.s32.totalorder %s19, 0
    %p66 = por %p64, %p65
    %p67 = scmp.ne.s32.totalorder %s53, %s54
    %p68 = scmp.eq.s32.totalorder %s20, 1
    %p69 = por %p67, %p68
    %p71 = scmp.ne.s32.totalorder %s54, %s70
    %p72 = scmp.eq.s32.totalorder %s20, 0
    %p73 = por %p71, %p72
    %s75 = sadd.s32 %s74, 1
    %p78 = scmp.eq.s32.totalorder %s14, 1
    %p79 = scmp.ne.s32.totalorder %s74, %s76
    %p80 = scmp.eq.s32.totalorder %s14, 0
    %p81 = por %p79, %p80
    %p82 = scmp.ne.s32.totalorder %s74, %s76
    %p83 = scmp.eq.s32.totalorder %s19, 1
    %p84 = por %p82, %p83
    %p85 = scmp.ne.s32.totalorder %s76, %s77
    %p86 = scmp.eq.s32.totalorder %s19, 0
    %p87 = por %p85, %p86
    %p88 = scmp.ne.s32.totalorder %s76, %s77
    %p89 = scmp.eq.s32.totalorder %s20, 1
    %p90 = por %p88, %p89
    %p92 = scmp.ne.s32.totalorder %s77, %s91
    %p93 = scmp.eq.s32.totalorder %s20, 0
    %p94 = por %p92, %p93
    %s96 = sadd.s32 %s95, 1
    %p99 = scmp.eq.s32.totalorder %s14, 1
    %p100 = scmp.ne.s32.totalorder %s95, %s97
    %p101 = scmp.eq.s32.totalorder %s14, 0
    %p102 = por %p100, %p101
    %p103 = scmp.ne.s32.totalorder %s95, %s97
    %p104 = scmp.eq.s32.totalorder %s19, 1
    %p105 = por %p103, %p104
    %p106 = scmp.ne.s32.totalorder %s97, %s98
    %p107 = scmp.eq.s32.totalorder %s19, 0
    %p108 = por %p106, %p107
    %p109 = scmp.ne.s32.totalorder %s97, %s98
    %p110 = scmp.eq.s32.totalorder %s20, 1
    %p111 = por %p109, %p110
    %p113 = scmp.ne.s32.totalorder %s98, %s112
    %p114 = scmp.eq.s32.totalorder %s20, 0
    %p115 = por %p113, %p114
    %s117 = sadd.s32 %s116, 1
    %p120 = scmp.eq.s32.totalorder %s14, 1
    %p121 = scmp.ne.s32.totalorder %s116, %s118
    %p122 = scmp.eq.s32.totalorder %s14, 0
    %p123 = por %p121, %p122
    %p124 = scmp.ne.s32.totalorder %s116, %s118
    %p125 = scmp.eq.s32.totalorder %s19, 1
    %p126 = por %p124, %p125
    %p127 = scmp.ne.s32.totalorder %s118, %s119
    %p128 = scmp.eq.s32.totalorder %s19, 0
    %p129 = por %p127, %p128
    %p130 = scmp.ne.s32.totalorder %s118, %s119
    %p131 = scmp.eq.s32.totalorder %s20, 1
    %p132 = por %p130, %p131
    %p134 = scmp.ne.s32.totalorder %s119, %s133
    %p135 = scmp.eq.s32.totalorder %s20, 0
    %p136 = por %p134, %p135
    %s138 = sadd.s32 %s137, 1
    %p141 = scmp.eq.s32.totalorder %s14, 1
    %p142 = scmp.ne.s32.totalorder %s137, %s139
    %p143 = scmp.eq.s32.totalorder %s14, 0
    %p144 = por %p142, %p143
    %p145 = scmp.ne.s32.totalorder %s137, %s139
    %p146 = scmp.eq.s32.totalorder %s19, 1
    %p147 = por %p145, %p146
    %p148 = scmp.ne.s32.totalorder %s139, %s140
    %p149 = scmp.eq.s32.totalorder %s19, 0
    %p150 = por %p148, %p149
    %p151 = scmp.ne.s32.totalorder %s139, %s140
    %p152 = scmp.eq.s32.totalorder %s20, 1
    %p153 = por %p151, %p152
    %p155 = scmp.ne.s32.totalorder %s140, %s154
    %p156 = scmp.eq.s32.totalorder %s20, 0
    %p157 = por %p155, %p156
    %s159 = sadd.s32 %s158, 1
    %p162 = scmp.eq.s32.totalorder %s14, 1
    %p163 = scmp.ne.s32.totalorder %s158, %s160
    %p164 = scmp.eq.s32.totalorder %s14, 0
    %p165 = por %p163, %p164
    %p166 = scmp.ne.s32.totalorder %s158, %s160
    %p167 = scmp.eq.s32.totalorder %s19, 1
    %p168 = por %p166, %p167
    %p169 = scmp.ne.s32.totalorder %s160, %s161
    %p170 = scmp.eq.s32.totalorder %s19, 0
    %p171 = por %p169, %p170
    %p172 = scmp.ne.s32.totalorder %s160, %s161
    %p173 = scmp.eq.s32.totalorder %s20, 1
    %p174 = por %p172, %p173
    %p176 = scmp.ne.s32.totalorder %s161, %s175
    %p177 = scmp.eq.s32.totalorder %s20, 0
    %p178 = por %p176, %p177
    %s180 = sadd.s32 %s179, 1
    %p183 = scmp.eq.s32.totalorder %s14, 1
    %p184 = scmp.ne.s32.totalorder %s179, %s181
    %p185 = scmp.eq.s32.totalorder %s14, 0
    %p186 = por %p184, %p185
    %p187 = scmp.ne.s32.totalorder %s179, %s181
    %p188 = scmp.eq.s32.totalorder %s19, 1
    %p189 = por %p187, %p188
    %p190 = scmp.ne.s32.totalorder %s181, %s182
    %p191 = scmp.eq.s32.totalorder %s19, 0
    %p192 = por %p190, %p191
    %p193 = scmp.ne.s32.totalorder %s181, %s182
    %p194 = scmp.eq.s32.totalorder %s20, 1
    %p195 = por %p193, %p194
    %p197 = scmp.ne.s32.totalorder %s182, %s196
    %p198 = scmp.eq.s32.totalorder %s20, 0
    %p199 = por %p197, %p198
    %s200 = ssub.s32 %s14, %s21
    %p201 = scmp.eq.s32.totalorder %s200, 0
    %s203 = sadd.s32 %s202, 1
    %s204 = scalar_select %p201, %s202, %s203
    %p207 = pneg %p201
    %p208 = scmp.eq.s32.totalorder %s14, 1
    %p209 = por %p207, %p208
    %p210 = scmp.ne.s32.totalorder %s202, %s205
    %p211 = scmp.eq.s32.totalorder %s14, 0
    %p212 = por %p210, %p211
    %p213 = scmp.ne.s32.totalorder %s202, %s205
    %p214 = scmp.eq.s32.totalorder %s19, 1
    %p215 = por %p213, %p214
    %p216 = scmp.ne.s32.totalorder %s205, %s206
    %p217 = scmp.eq.s32.totalorder %s19, 0
    %p218 = por %p216, %p217
    %p219 = scmp.ne.s32.totalorder %s205, %s206
    %p220 = scmp.eq.s32.totalorder %s20, 1
    %p221 = por %p219, %p220
    %p223 = scmp.ne.s32.totalorder %s206, %s222
    %p224 = scmp.eq.s32.totalorder %s20, 0
    %p225 = por %p223, %p224
    %p226 = scmp.le.s32.totalorder 1, %s14
    %p227 = scmp.lt.s32.totalorder %s14, 3
    %p228 = pnand %p226, %p227
    %p229 = pneg %p228
    // Predicated region
    $region9: #{concat_forward.1} parent=5 // pred_check
      _
    $region10: #{concat_forward.1} parent=5 // pred_check_branch
      %231 = sbr.rel (%p228) target = $region12
    $region11: #{concat_forward.1} parent=5 // pred_region
      %s232 = ssub.s32 %s14, 1
      // Predicated region
      $region13: #{concat_forward.1} parent=11 // pred_check
        %p233 = pneg %p87
      $region14: #{concat_forward.1} parent=11 // pred_check_branch
        %235 = sbr.rel (%p233) target = $region16
      $region15: #{concat_forward.1} parent=11 // pred_region
        _
      $region16: #{concat_forward.1} parent=11 // pred_fallthru
        _
      // Predicated region
      $region17: #{concat_forward.1} parent=11 // pred_check
        %p236 = pneg %p108
      $region18: #{concat_forward.1} parent=11 // pred_check_branch
        %238 = sbr.rel (%p236) target = $region20
      $region19: #{concat_forward.1} parent=11 // pred_region
        _
      $region20: #{concat_forward.1} parent=11 // pred_fallthru
        _
      // Predicated region
      $region21: #{concat_forward.1} parent=11 // pred_check
        %p239 = pneg %p129
      $region22: #{concat_forward.1} parent=11 // pred_check_branch
        %241 = sbr.rel (%p239) target = $region24
      $region23: #{concat_forward.1} parent=11 // pred_region
        _
      $region24: #{concat_forward.1} parent=11 // pred_fallthru
        _
      // Predicated region
      $region25: #{concat_forward.1} parent=11 // pred_check
        %p242 = pneg %p150
      $region26: #{concat_forward.1} parent=11 // pred_check_branch
        %244 = sbr.rel (%p242) target = $region28
      $region27: #{concat_forward.1} parent=11 // pred_region
        _
      $region28: #{concat_forward.1} parent=11 // pred_fallthru
        _
      // Predicated region
      $region29: #{concat_forward.1} parent=11 // pred_check
        %p245 = pneg %p171
      $region30: #{concat_forward.1} parent=11 // pred_check_branch
        %247 = sbr.rel (%p245) target = $region32
      $region31: #{concat_forward.1} parent=11 // pred_region
        _
      $region32: #{concat_forward.1} parent=11 // pred_fallthru
        _
      // Predicated region
      $region33: #{concat_forward.1} parent=11 // pred_check
        %p248 = pneg %p192
      $region34: #{concat_forward.1} parent=11 // pred_check_branch
        %250 = sbr.rel (%p248) target = $region36
      $region35: #{concat_forward.1} parent=11 // pred_region
        _
      $region36: #{concat_forward.1} parent=11 // pred_fallthru
        _
    $region12: #{concat_forward.1} parent=5 // pred_fallthru
      _
    %p251 = scmp.lt.s32.totalorder %s14, 2
    // Predicated region
    $region37: #{concat_forward.1} parent=5 // pred_check
      %p252 = pneg %p251
    $region38: #{concat_forward.1} parent=5 // pred_check_branch
      %254 = sbr.rel (%p252) target = $region40
    $region39: #{concat_forward.1} parent=5 // pred_region
      // Predicated region
      $region41: #{concat_forward.1} parent=39 // pred_check
        %p255 = pneg %p34
      $region42: #{concat_forward.1} parent=39 // pred_check_branch
        %257 = sbr.rel (%p255) target = $region44
      $region43: #{concat_forward.1} parent=39 // pred_region
        %p258 = scmp.lt.s32.totalorder %s14, 1
        %s259 = scalar_select %p258, %s14, 1
        %s260 = smul.addr %s259, 2
        %s261 = smul.addr %s260, 8
        %s262 = scalar_lea.vmem %s0, %s261
      $region44: #{concat_forward.1} parent=39 // pred_fallthru
        _
      // Predicated region
      $region45: #{concat_forward.1} parent=39 // pred_check
        %p263 = pneg %p60
      $region46: #{concat_forward.1} parent=39 // pred_check_branch
        %265 = sbr.rel (%p263) target = $region48
      $region47: #{concat_forward.1} parent=39 // pred_region
        %p266 = scmp.lt.s32.totalorder %s14, 1
        %s267 = scalar_select %p266, %s14, 1
        %s268 = smul.addr %s267, 2
        %s269 = smul.addr %s268, 8
        %s270 = scalar_lea.vmem %s1, %s269
      $region48: #{concat_forward.1} parent=39 // pred_fallthru
        _
    $region40: #{concat_forward.1} parent=5 // pred_fallthru
      _
    %p271 = scmp.le.s32.totalorder 1, %s14
    %p272 = scmp.lt.s32.totalorder %s14, 3
    %p273 = pnand %p271, %p272
    %p274 = pneg %p273
    // Predicated region
    $region49: #{concat_forward.1} parent=5 // pred_check
      _
    $region50: #{concat_forward.1} parent=5 // pred_check_branch
      %276 = sbr.rel (%p273) target = $region52
    $region51: #{concat_forward.1} parent=5 // pred_region
      %s277 = ssub.s32 %s14, 1
      %p278 = scmp.lt.s32.totalorder %s19, 1
      %s279 = scalar_select %p278, %s19, 1
      %s280 = smul.addr %s279, 2
      %s281 = smul.addr %s280, 8
      %s282 = scalar_lea.vmem %s0, %s281
      %p283 = pneg %p40
      %p284 = pneg %p37
      %p285 = scmp.lt.s32.totalorder %s19, 1
      %s286 = scalar_select %p285, %s19, 1
      %s287 = smul.addr %s286, 2
      %s288 = smul.addr %s287, 8
      %s289 = scalar_lea.vmem %s1, %s288
      %p290 = pneg %p66
      %p291 = pneg %p63
      %p292 = pneg %p87
      %p293 = pneg %p84
      %p294 = pneg %p108
      %p295 = pneg %p105
      %p296 = pneg %p129
      %p297 = pneg %p126
      %p298 = pneg %p150
      %p299 = pneg %p147
      %p300 = pneg %p171
      %p301 = pneg %p168
      %p302 = pneg %p192
      %p303 = pneg %p189
      %p304 = pneg %p218
      %p305 = pneg %p215
      %p306 = scmp.lt.s32.totalorder %s19, 1
      %s307 = scalar_select %p306, %s19, 1
      %s308 = smul.addr %s307, 2
      %s309 = smul.addr %s308, 4
      %s310 = scalar_lea.vmem %s8, %s309
      %p311 = scmp.lt.s32.totalorder %s19, 1
      %s312 = scalar_select %p311, %s19, 1
      %s313 = smul.addr %s312, 2
      %s314 = smul.addr %s313, 8
      %s315 = scalar_lea.vmem %s0, %s314
      %p316 = scmp.lt.s32.totalorder %s19, 1
      %s317 = scalar_select %p316, %s19, 1
      %s318 = smul.addr %s317, 2
      %s319 = smul.addr %s318, 8
      %s320 = scalar_lea.vmem %s1, %s319
      %p321 = scmp.lt.s32.totalorder %s19, 1
      %s322 = scalar_select %p321, %s19, 1
      %s323 = smul.addr %s322, 2
      %s324 = smul.addr %s323, 4
      %s325 = scalar_lea.vmem %s8, %s324
      %v326 = vld [vmem:[%s315] sm:$0xff]
      %v327 = vld [vmem:[%s315 + $0x8] sm:$0xff]
      %328 = vrot.lane.b32.xlu0 %v326, 17
      %v329 = vpop.permute.xlu0 %328
      %330 = vrot.lane.b32.xlu0 %v327, 17
      %v331 = vpop.permute.xlu0 %330
      %v332 = vlaneseq
      %v333 = vand.u32 %v332, 127
      %vm334 = vcmp.lt.s32.totalorder %v333, 17
      %v335 = vsel %vm334, %v329, %v331
      %v336 = vsel %vm334, %v331, %v329
      %v337 = vld [vmem:[%s2] sm:$0xff]
      %v338 = vld [vmem:[%s2 + $0x8] sm:$0xff]
      %v339 = vmul.f32 %v336, %v337
      %v340 = vmul.f32 %v335, %v338
      %341 = vst [vmem:[#allocation2] sm:$0xff] %v339
      %342 = vst [vmem:[#allocation2 + $0x8] sm:$0xff] %v340
      %343 = vrot.lane.b32.xlu0 %v326, 16
      %v344 = vpop.permute.xlu0 %343
      %345 = vrot.lane.b32.xlu0 %v327, 16
      %v346 = vpop.permute.xlu0 %345
      %vm347 = vcmp.lt.s32.totalorder %v333, 16
      %v348 = vsel %vm347, %v344, %v346
      %v349 = vsel %vm347, %v346, %v344
      %s350 = scalar_lea.vmem %s2, 16
      %v351 = vld [vmem:[%s350] sm:$0xff]
      %v352 = vld [vmem:[%s350 + $0x8] sm:$0xff]
      %v353 = vmul.f32 %v349, %v351
      %v354 = vmul.f32 %v348, %v352
      %355 = vst [vmem:[#allocation2 + $0x10] sm:$0xff] %v353
      %356 = vst [vmem:[#allocation2 + $0x18] sm:$0xff] %v354
      %357 = vrot.lane.b32.xlu0 %v326, 15
      %v358 = vpop.permute.xlu0 %357
      %359 = vrot.lane.b32.xlu0 %v327, 15
      %v360 = vpop.permute.xlu0 %359
      %vm361 = vcmp.lt.s32.totalorder %v333, 15
      %v362 = vsel %vm361, %v358, %v360
      %v363 = vsel %vm361, %v360, %v358
      %s364 = scalar_lea.vmem %s2, 32
      %v365 = vld [vmem:[%s364] sm:$0xff]
      %v366 = vld [vmem:[%s364 + $0x8] sm:$0xff]
      %v367 = vmul.f32 %v363, %v365
      %v368 = vmul.f32 %v362, %v366
      %369 = vst [vmem:[#allocation2 + $0x20] sm:$0xff] %v367
      %370 = vst [vmem:[#allocation2 + $0x28] sm:$0xff] %v368
      %371 = vrot.lane.b32.xlu0 %v326, 1
      %v372 = vpop.permute.xlu0 %371
      %373 = vrot.lane.b32.xlu0 %v327, 1
      %v374 = vpop.permute.xlu0 %373
      %vm375 = vcmp.lt.s32.totalorder %v333, 1
      %v376 = vsel %vm375, %v372, %v374
      %v377 = vsel %vm375, %v374, %v372
      %s378 = scalar_lea.vmem %s2, 48
      %v379 = vld [vmem:[%s378] sm:$0xff]
      %v380 = vld [vmem:[%s378 + $0x8] sm:$0xff]
      %v381 = vmul.f32 %v377, %v379
      %v382 = vmul.f32 %v376, %v380
      %383 = vst [vmem:[#allocation2 + $0x30] sm:$0xff] %v381
      %384 = vst [vmem:[#allocation2 + $0x38] sm:$0xff] %v382
      %s385 = scalar_lea.vmem %s2, 64
      %v386 = vld [vmem:[%s385] sm:$0xff]
      %v387 = vld [vmem:[%s385 + $0x8] sm:$0xff]
      %v388 = vmul.f32 %v326, %v386
      %v389 = vmul.f32 %v327, %v387
      %390 = vst [vmem:[#allocation2 + $0x40] sm:$0xff] %v388
      %391 = vst [vmem:[#allocation2 + $0x48] sm:$0xff] %v389
      %392 = vrot.lane.b32.xlu0 %v326, 127
      %v393 = vpop.permute.xlu0 %392
      %394 = vrot.lane.b32.xlu0 %v327, 127
      %v395 = vpop.permute.xlu0 %394
      %vm396 = vcmp.lt.s32.totalorder %v333, 127
      %v397 = vsel %vm396, %v393, %v395
      %v398 = vsel %vm396, %v395, %v393
      %s399 = scalar_lea.vmem %s2, 80
      %v400 = vld [vmem:[%s399] sm:$0xff]
      %v401 = vld [vmem:[%s399 + $0x8] sm:$0xff]
      %v402 = vmul.f32 %v397, %v400
      %v403 = vmul.f32 %v398, %v401
      %404 = vst [vmem:[#allocation2 + $0x50] sm:$0xff] %v402
      %405 = vst [vmem:[#allocation2 + $0x58] sm:$0xff] %v403
      %406 = vrot.lane.b32.xlu0 %v326, 113
      %v407 = vpop.permute.xlu0 %406
      %408 = vrot.lane.b32.xlu0 %v327, 113
      %v409 = vpop.permute.xlu0 %408
      %vm410 = vcmp.lt.s32.totalorder %v333, 113
      %v411 = vsel %vm410, %v407, %v409
      %v412 = vsel %vm410, %v409, %v407
      %s413 = scalar_lea.vmem %s2, 96
      %v414 = vld [vmem:[%s413] sm:$0xff]
      %v415 = vld [vmem:[%s413 + $0x8] sm:$0xff]
      %v416 = vmul.f32 %v411, %v414
      %v417 = vmul.f32 %v412, %v415
      %418 = vst [vmem:[#allocation2 + $0x60] sm:$0xff] %v416
      %419 = vst [vmem:[#allocation2 + $0x68] sm:$0xff] %v417
      %420 = vrot.lane.b32.xlu0 %v326, 112
      %v421 = vpop.permute.xlu0 %420
      %422 = vrot.lane.b32.xlu0 %v327, 112
      %v423 = vpop.permute.xlu0 %422
      %vm424 = vcmp.lt.s32.totalorder %v333, 112
      %v425 = vsel %vm424, %v421, %v423
      %v426 = vsel %vm424, %v423, %v421
      %s427 = scalar_lea.vmem %s2, 112
      %v428 = vld [vmem:[%s427] sm:$0xff]
      %v429 = vld [vmem:[%s427 + $0x8] sm:$0xff]
      %v430 = vmul.f32 %v425, %v428
      %v431 = vmul.f32 %v426, %v429
      %432 = vst [vmem:[#allocation2 + $0x70] sm:$0xff] %v430
      %433 = vst [vmem:[#allocation2 + $0x78] sm:$0xff] %v431
      %434 = vrot.lane.b32.xlu0 %v326, 111
      %v435 = vpop.permute.xlu0 %434
      %436 = vrot.lane.b32.xlu0 %v327, 111
      %v437 = vpop.permute.xlu0 %436
      %vm438 = vcmp.lt.s32.totalorder %v333, 111
      %v439 = vsel %vm438, %v435, %v437
      %v440 = vsel %vm438, %v437, %v435
      %s441 = scalar_lea.vmem %s2, 128
      %v442 = vld [vmem:[%s441] sm:$0xff]
      %v443 = vld [vmem:[%s441 + $0x8] sm:$0xff]
      %v444 = vmul.f32 %v439, %v442
      %v445 = vmul.f32 %v440, %v443
      %446 = vst [vmem:[#allocation2 + $0x80] sm:$0xff] %v444
      %447 = vst [vmem:[#allocation2 + $0x88] sm:$0xff] %v445
      %v448 = vld [vmem:[%s3] sm:$0xff]
      %v449 = vld [vmem:[#allocation2] sm:$0xff]
      %v450 = vld [vmem:[#allocation2 + $0x8] sm:$0xff]
      %v451 = vld [vmem:[#allocation2 + $0x10] sm:$0xff]
      %v452 = vld [vmem:[#allocation2 + $0x18] sm:$0xff]
      %v453 = vld [vmem:[#allocation2 + $0x20] sm:$0xff]
      %v454 = vld [vmem:[#allocation2 + $0x28] sm:$0xff]
      %v455 = vld [vmem:[#allocation2 + $0x30] sm:$0xff]
      %v456 = vld [vmem:[#allocation2 + $0x38] sm:$0xff]
      %v457 = vld [vmem:[#allocation2 + $0x40] sm:$0xff]
      %v458 = vld [vmem:[#allocation2 + $0x48] sm:$0xff]
      %v459 = vld [vmem:[#allocation2 + $0x50] sm:$0xff]
      %v460 = vld [vmem:[#allocation2 + $0x58] sm:$0xff]
      %v461 = vld [vmem:[#allocation2 + $0x60] sm:$0xff]
      %v462 = vld [vmem:[#allocation2 + $0x68] sm:$0xff]
      %v463 = vld [vmem:[#allocation2 + $0x70] sm:$0xff]
      %v464 = vld [vmem:[#allocation2 + $0x78] sm:$0xff]
      %v465 = vld [vmem:[#allocation2 + $0x80] sm:$0xff]
      %v466 = vld [vmem:[#allocation2 + $0x88] sm:$0xff]
      %v467 = vld [vmem:[%s320] sm:$0xff]
      %v468 = vld [vmem:[%s320 + $0x8] sm:$0xff]
      %469 = vrot.lane.b32.xlu0 %v467, 17
      %v470 = vpop.permute.xlu0 %469
      %471 = vrot.lane.b32.xlu0 %v468, 17
      %v472 = vpop.permute.xlu0 %471
      %v473 = vsel %vm334, %v470, %v472
      %v474 = vsel %vm334, %v472, %v470
      %v475 = vld [vmem:[%s2] sm:$0xff]
      %v476 = vld [vmem:[%s2 + $0x8] sm:$0xff]
      %v477 = vmul.f32 %v474, %v475
      %v478 = vmul.f32 %v473, %v476
      %479 = vst [vmem:[#allocation2] sm:$0xff] %v477
      %480 = vst [vmem:[#allocation2 + $0x8] sm:$0xff] %v478
      %481 = vrot.lane.b32.xlu0 %v467, 16
      %v482 = vpop.permute.xlu0 %481
      %483 = vrot.lane.b32.xlu0 %v468, 16
      %v484 = vpop.permute.xlu0 %483
      %v485 = vsel %vm347, %v482, %v484
      %v486 = vsel %vm347, %v484, %v482
      %v487 = vld [vmem:[%s350] sm:$0xff]
      %v488 = vld [vmem:[%s350 + $0x8] sm:$0xff]
      %v489 = vmul.f32 %v486, %v487
      %v490 = vmul.f32 %v485, %v488
      %491 = vst [vmem:[#allocation2 + $0x10] sm:$0xff] %v489
      %492 = vst [vmem:[#allocation2 + $0x18] sm:$0xff] %v490
      %493 = vrot.lane.b32.xlu0 %v467, 15
      %v494 = vpop.permute.xlu0 %493
      %495 = vrot.lane.b32.xlu0 %v468, 15
      %v496 = vpop.permute.xlu0 %495
      %v497 = vsel %vm361, %v494, %v496
      %v498 = vsel %vm361, %v496, %v494
      %v499 = vld [vmem:[%s364] sm:$0xff]
      %v500 = vld [vmem:[%s364 + $0x8] sm:$0xff]
      %v501 = vmul.f32 %v498, %v499
      %v502 = vmul.f32 %v497, %v500
      %503 = vst [vmem:[#allocation2 + $0x20] sm:$0xff] %v501
      %504 = vst [vmem:[#allocation2 + $0x28] sm:$0xff] %v502
      %505 = vrot.lane.b32.xlu0 %v467, 1
      %v506 = vpop.permute.xlu0 %505
      %507 = vrot.lane.b32.xlu0 %v468, 1
      %v508 = vpop.permute.xlu0 %507
      %v509 = vsel %vm375, %v506, %v508
      %v510 = vsel %vm375, %v508, %v506
      %v511 = vld [vmem:[%s378] sm:$0xff]
      %v512 = vld [vmem:[%s378 + $0x8] sm:$0xff]
      %v513 = vmul.f32 %v510, %v511
      %v514 = vmul.f32 %v509, %v512
      %515 = vst [vmem:[#allocation2 + $0x30] sm:$0xff] %v513
      %516 = vst [vmem:[#allocation2 + $0x38] sm:$0xff] %v514
      %v517 = vld [vmem:[%s385] sm:$0xff]
      %v518 = vld [vmem:[%s385 + $0x8] sm:$0xff]
      %v519 = vmul.f32 %v467, %v517
      %v520 = vmul.f32 %v468, %v518
      %521 = vst [vmem:[#allocation2 + $0x40] sm:$0xff] %v519
      %522 = vst [vmem:[#allocation2 + $0x48] sm:$0xff] %v520
      %523 = vrot.lane.b32.xlu0 %v467, 127
      %v524 = vpop.permute.xlu0 %523
      %525 = vrot.lane.b32.xlu0 %v468, 127
      %v526 = vpop.permute.xlu0 %525
      %v527 = vsel %vm396, %v524, %v526
      %v528 = vsel %vm396, %v526, %v524
      %v529 = vld [vmem:[%s399] sm:$0xff]
      %v530 = vld [vmem:[%s399 + $0x8] sm:$0xff]
      %v531 = vmul.f32 %v527, %v529
      %v532 = vmul.f32 %v528, %v530
      %533 = vst [vmem:[#allocation2 + $0x50] sm:$0xff] %v531
      %534 = vst [vmem:[#allocation2 + $0x58] sm:$0xff] %v532
      %535 = vrot.lane.b32.xlu0 %v467, 113
      %v536 = vpop.permute.xlu0 %535
      %537 = vrot.lane.b32.xlu0 %v468, 113
      %v538 = vpop.permute.xlu0 %537
      %v539 = vsel %vm410, %v536, %v538
      %v540 = vsel %vm410, %v538, %v536
      %v541 = vld [vmem:[%s413] sm:$0xff]
      %v542 = vld [vmem:[%s413 + $0x8] sm:$0xff]
      %v543 = vmul.f32 %v539, %v541
      %v544 = vmul.f32 %v540, %v542
      %545 = vst [vmem:[#allocation2 + $0x60] sm:$0xff] %v543
      %546 = vst [vmem:[#allocation2 + $0x68] sm:$0xff] %v544
      %547 = vrot.lane.b32.xlu0 %v467, 112
      %v548 = vpop.permute.xlu0 %547
      %549 = vrot.lane.b32.xlu0 %v468, 112
      %v550 = vpop.permute.xlu0 %549
      %v551 = vsel %vm424, %v548, %v550
      %v552 = vsel %vm424, %v550, %v548
      %v553 = vld [vmem:[%s427] sm:$0xff]
      %v554 = vld [vmem:[%s427 + $0x8] sm:$0xff]
      %v555 = vmul.f32 %v551, %v553
      %v556 = vmul.f32 %v552, %v554
      %557 = vst [vmem:[#allocation2 + $0x70] sm:$0xff] %v555
      %558 = vst [vmem:[#allocation2 + $0x78] sm:$0xff] %v556
      %559 = vrot.lane.b32.xlu0 %v467, 111
      %v560 = vpop.permute.xlu0 %559
      %561 = vrot.lane.b32.xlu0 %v468, 111
      %v562 = vpop.permute.xlu0 %561
      %v563 = vsel %vm438, %v560, %v562
      %v564 = vsel %vm438, %v562, %v560
      %v565 = vld [vmem:[%s441] sm:$0xff]
      %v566 = vld [vmem:[%s441 + $0x8] sm:$0xff]
      %v567 = vmul.f32 %v563, %v565
      %v568 = vmul.f32 %v564, %v566
      %569 = vst [vmem:[#allocation2 + $0x80] sm:$0xff] %v567
      %570 = vst [vmem:[#allocation2 + $0x88] sm:$0xff] %v568
      %v571 = vld [vmem:[%s4] sm:$0xff]
      %v572 = vld [vmem:[#allocation2] sm:$0xff]
      %v573 = vld [vmem:[#allocation2 + $0x8] sm:$0xff]
      %v574 = vld [vmem:[#allocation2 + $0x10] sm:$0xff]
      %v575 = vld [vmem:[#allocation2 + $0x18] sm:$0xff]
      %v576 = vld [vmem:[#allocation2 + $0x20] sm:$0xff]
      %v577 = vld [vmem:[#allocation2 + $0x28] sm:$0xff]
      %v578 = vld [vmem:[#allocation2 + $0x30] sm:$0xff]
      %v579 = vld [vmem:[#allocation2 + $0x38] sm:$0xff]
      %v580 = vld [vmem:[#allocation2 + $0x40] sm:$0xff]
      %v581 = vld [vmem:[#allocation2 + $0x48] sm:$0xff]
      %v582 = vld [vmem:[#allocation2 + $0x50] sm:$0xff]
      %v583 = vld [vmem:[#allocation2 + $0x58] sm:$0xff]
      %v584 = vld [vmem:[#allocation2 + $0x60] sm:$0xff]
      %v585 = vld [vmem:[#allocation2 + $0x68] sm:$0xff]
      %v586 = vld [vmem:[#allocation2 + $0x70] sm:$0xff]
      %v587 = vld [vmem:[#allocation2 + $0x78] sm:$0xff]
      %v588 = vld [vmem:[#allocation2 + $0x80] sm:$0xff]
      %v589 = vld [vmem:[#allocation2 + $0x88] sm:$0xff]
      %vm590 = vcmask 588800
      %v592 = vsel %vm590, %v571, 0
      %594 = vmatpush.msra.mxu0 0.0
      %595 = vmatpush.msra.mxu0 0.0
      %596 = vmatpush.msra.mxu0 0.0
      %597 = vmatpush.msra.mxu0 0.0
      %598 = vmatpush.msra.mxu0 0.0
      %599 = vmatpush.msra.mxu0 0.0
      %600 = vmatpush.msra.mxu0 0.0
      %601 = vmatpush.msra.mxu0 %v588
      %602 = vmatpush.msra.mxu0 %v586
      %603 = vmatpush.msra.mxu0 %v584
      %604 = vmatpush.msra.mxu0 %v582
      %605 = vmatpush.msra.mxu0 %v580
      %606 = vmatpush.msra.mxu0 %v578
      %607 = vmatpush.msra.mxu0 %v576
      %608 = vmatpush.msra.mxu0 %v574
      %609 = vmatpush.msra.mxu0 %v572
      %610 = vmatmul.f32.gmra.mxu0 %v592
      %v611 = vpop.f32.mrf.mxu0
      %v612 = vadd.f32 0.0, %v611
      %613 = vdwg.mxu0
      %614 = vmatpush.msra.mxu0 0.0
      %615 = vmatpush.msra.mxu0 0.0
      %616 = vmatpush.msra.mxu0 0.0
      %617 = vmatpush.msra.mxu0 0.0
      %618 = vmatpush.msra.mxu0 0.0
      %619 = vmatpush.msra.mxu0 0.0
      %620 = vmatpush.msra.mxu0 0.0
      %621 = vmatpush.msra.mxu0 %v589
      %622 = vmatpush.msra.mxu0 %v587
      %623 = vmatpush.msra.mxu0 %v585
      %624 = vmatpush.msra.mxu0 %v583
      %625 = vmatpush.msra.mxu0 %v581
      %626 = vmatpush.msra.mxu0 %v579
      %627 = vmatpush.msra.mxu0 %v577
      %628 = vmatpush.msra.mxu0 %v575
      %629 = vmatpush.msra.mxu0 %v573
      %630 = vmatmul.f32.gmra.mxu0 %v592
      %v631 = vpop.f32.mrf.mxu0
      %v632 = vadd.f32 0.0, %v631
      %633 = vdwg.mxu0
      %v635 = vsel %vm590, %v448, 0
      %637 = vmatpush.msra.mxu0 0.0
      %638 = vmatpush.msra.mxu0 0.0
      %639 = vmatpush.msra.mxu0 0.0
      %640 = vmatpush.msra.mxu0 0.0
      %641 = vmatpush.msra.mxu0 0.0
      %642 = vmatpush.msra.mxu0 0.0
      %643 = vmatpush.msra.mxu0 0.0
      %644 = vmatpush.msra.mxu0 %v465
      %645 = vmatpush.msra.mxu0 %v463
      %646 = vmatpush.msra.mxu0 %v461
      %647 = vmatpush.msra.mxu0 %v459
      %648 = vmatpush.msra.mxu0 %v457
      %649 = vmatpush.msra.mxu0 %v455
      %650 = vmatpush.msra.mxu0 %v453
      %651 = vmatpush.msra.mxu0 %v451
      %652 = vmatpush.msra.mxu0 %v449
      %653 = vmatmul.f32.gmra.mxu0 %v635
      %v654 = vpop.f32.mrf.mxu0
      %v655 = vadd.f32 %v612, %v654
      %656 = vdwg.mxu0
      %657 = vmatpush.msra.mxu0 0.0
      %658 = vmatpush.msra.mxu0 0.0
      %659 = vmatpush.msra.mxu0 0.0
      %660 = vmatpush.msra.mxu0 0.0
      %661 = vmatpush.msra.mxu0 0.0
      %662 = vmatpush.msra.mxu0 0.0
      %663 = vmatpush.msra.mxu0 0.0
      %664 = vmatpush.msra.mxu0 %v466
      %665 = vmatpush.msra.mxu0 %v464
      %666 = vmatpush.msra.mxu0 %v462
      %667 = vmatpush.msra.mxu0 %v460
      %668 = vmatpush.msra.mxu0 %v458
      %669 = vmatpush.msra.mxu0 %v456
      %670 = vmatpush.msra.mxu0 %v454
      %671 = vmatpush.msra.mxu0 %v452
      %672 = vmatpush.msra.mxu0 %v450
      %673 = vmatmul.f32.gmra.mxu0 %v635
      %v674 = vpop.f32.mrf.mxu0
      %v675 = vadd.f32 %v632, %v674
      %676 = vdwg.mxu0
      %v677 = vld [vmem:[%s5] sm:$0xff]
      %679 = vset.pattern.permute.xlu0 0
      %680 = vperm.xlu0 %679, %v677
      %v681 = vpop.permute.xlu0 %680
      %v683 = vadd.f32 %v655, %v681
      %v684 = vadd.f32 %v675, %v681
      %vm685 = vcmp.gt.f32.partialorder %v683, 0.0
      %vm686 = vcmp.gt.f32.partialorder %v684, 0.0
      %v687 = vmul.f32 %v683, 0.01
      %v688 = vmul.f32 %v684, 0.01
      %v689 = vsel %vm685, %v683, %v687
      %v690 = vsel %vm686, %v684, %v688
      %691 = vrot.lane.b32.xlu0 %v689, 17
      %v692 = vpop.permute.xlu0 %691
      %693 = vrot.lane.b32.xlu0 %v690, 17
      %v694 = vpop.permute.xlu0 %693
      %v695 = vsel %vm334, %v692, %v694
      %v696 = vsel %vm334, %v694, %v692
      %v697 = vld [vmem:[%s2] sm:$0xff]
      %v698 = vld [vmem:[%s2 + $0x8] sm:$0xff]
      %v699 = vmul.f32 %v696, %v697
      %v700 = vmul.f32 %v695, %v698
      %701 = vst [vmem:[#allocation2] sm:$0xff] %v699
      %702 = vst [vmem:[#allocation2 + $0x8] sm:$0xff] %v700
      %703 = vrot.lane.b32.xlu0 %v689, 16
      %v704 = vpop.permute.xlu0 %703
      %705 = vrot.lane.b32.xlu0 %v690, 16
      %v706 = vpop.permute.xlu0 %705
      %v707 = vsel %vm347, %v704, %v706
      %v708 = vsel %vm347, %v706, %v704
      %v709 = vld [vmem:[%s350] sm:$0xff]
      %v710 = vld [vmem:[%s350 + $0x8] sm:$0xff]
      %v711 = vmul.f32 %v708, %v709
      %v712 = vmul.f32 %v707, %v710
      %713 = vst [vmem:[#allocation2 + $0x10] sm:$0xff] %v711
      %714 = vst [vmem:[#allocation2 + $0x18] sm:$0xff] %v712
      %715 = vrot.lane.b32.xlu0 %v689, 15
      %v716 = vpop.permute.xlu0 %715
      %717 = vrot.lane.b32.xlu0 %v690, 15
      %v718 = vpop.permute.xlu0 %717
      %v719 = vsel %vm361, %v716, %v718
      %v720 = vsel %vm361, %v718, %v716
      %v721 = vld [vmem:[%s364] sm:$0xff]
      %v722 = vld [vmem:[%s364 + $0x8] sm:$0xff]
      %v723 = vmul.f32 %v720, %v721
      %v724 = vmul.f32 %v719, %v722
      %725 = vst [vmem:[#allocation2 + $0x20] sm:$0xff] %v723
      %726 = vst [vmem:[#allocation2 + $0x28] sm:$0xff] %v724
      %727 = vrot.lane.b32.xlu0 %v689, 1
      %v728 = vpop.permute.xlu0 %727
      %729 = vrot.lane.b32.xlu0 %v690, 1
      %v730 = vpop.permute.xlu0 %729
      %v731 = vsel %vm375, %v728, %v730
      %v732 = vsel %vm375, %v730, %v728
      %v733 = vld [vmem:[%s378] sm:$0xff]
      %v734 = vld [vmem:[%s378 + $0x8] sm:$0xff]
      %v735 = vmul.f32 %v732, %v733
      %v736 = vmul.f32 %v731, %v734
      %737 = vst [vmem:[#allocation2 + $0x30] sm:$0xff] %v735
      %738 = vst [vmem:[#allocation2 + $0x38] sm:$0xff] %v736
      %v739 = vld [vmem:[%s385] sm:$0xff]
      %v740 = vld [vmem:[%s385 + $0x8] sm:$0xff]
      %v741 = vmul.f32 %v689, %v739
      %v742 = vmul.f32 %v690, %v740
      %743 = vst [vmem:[#allocation2 + $0x40] sm:$0xff] %v741
      %744 = vst [vmem:[#allocation2 + $0x48] sm:$0xff] %v742
      %745 = vrot.lane.b32.xlu0 %v689, 127
      %v746 = vpop.permute.xlu0 %745
      %747 = vrot.lane.b32.xlu0 %v690, 127
      %v748 = vpop.permute.xlu0 %747
      %v749 = vsel %vm396, %v746, %v748
      %v750 = vsel %vm396, %v748, %v746
      %v751 = vld [vmem:[%s399] sm:$0xff]
      %v752 = vld [vmem:[%s399 + $0x8] sm:$0xff]
      %v753 = vmul.f32 %v749, %v751
      %v754 = vmul.f32 %v750, %v752
      %755 = vst [vmem:[#allocation2 + $0x50] sm:$0xff] %v753
      %756 = vst [vmem:[#allocation2 + $0x58] sm:$0xff] %v754
      %757 = vrot.lane.b32.xlu0 %v689, 113
      %v758 = vpop.permute.xlu0 %757
      %759 = vrot.lane.b32.xlu0 %v690, 113
      %v760 = vpop.permute.xlu0 %759
      %v761 = vsel %vm410, %v758, %v760
      %v762 = vsel %vm410, %v760, %v758
      %v763 = vld [vmem:[%s413] sm:$0xff]
      %v764 = vld [vmem:[%s413 + $0x8] sm:$0xff]
      %v765 = vmul.f32 %v761, %v763
      %v766 = vmul.f32 %v762, %v764
      %767 = vst [vmem:[#allocation2 + $0x60] sm:$0xff] %v765
      %768 = vst [vmem:[#allocation2 + $0x68] sm:$0xff] %v766
      %769 = vrot.lane.b32.xlu0 %v689, 112
      %v770 = vpop.permute.xlu0 %769
      %771 = vrot.lane.b32.xlu0 %v690, 112
      %v772 = vpop.permute.xlu0 %771
      %v773 = vsel %vm424, %v770, %v772
      %v774 = vsel %vm424, %v772, %v770
      %v775 = vld [vmem:[%s427] sm:$0xff]
      %v776 = vld [vmem:[%s427 + $0x8] sm:$0xff]
      %v777 = vmul.f32 %v773, %v775
      %v778 = vmul.f32 %v774, %v776
      %779 = vst [vmem:[#allocation2 + $0x70] sm:$0xff] %v777
      %780 = vst [vmem:[#allocation2 + $0x78] sm:$0xff] %v778
      %781 = vrot.lane.b32.xlu0 %v689, 111
      %v782 = vpop.permute.xlu0 %781
      %783 = vrot.lane.b32.xlu0 %v690, 111
      %v784 = vpop.permute.xlu0 %783
      %v785 = vsel %vm438, %v782, %v784
      %v786 = vsel %vm438, %v784, %v782
      %v787 = vld [vmem:[%s441] sm:$0xff]
      %v788 = vld [vmem:[%s441 + $0x8] sm:$0xff]
      %v789 = vmul.f32 %v785, %v787
      %v790 = vmul.f32 %v786, %v788
      %791 = vst [vmem:[#allocation2 + $0x80] sm:$0xff] %v789
      %792 = vst [vmem:[#allocation2 + $0x88] sm:$0xff] %v790
      %v793 = vld [vmem:[%s6] sm:$0xff]
      %v794 = vld [vmem:[#allocation2] sm:$0xff]
      %v795 = vld [vmem:[#allocation2 + $0x8] sm:$0xff]
      %v796 = vld [vmem:[#allocation2 + $0x10] sm:$0xff]
      %v797 = vld [vmem:[#allocation2 + $0x18] sm:$0xff]
      %v798 = vld [vmem:[#allocation2 + $0x20] sm:$0xff]
      %v799 = vld [vmem:[#allocation2 + $0x28] sm:$0xff]
      %v800 = vld [vmem:[#allocation2 + $0x30] sm:$0xff]
      %v801 = vld [vmem:[#allocation2 + $0x38] sm:$0xff]
      %v802 = vld [vmem:[#allocation2 + $0x40] sm:$0xff]
      %v803 = vld [vmem:[#allocation2 + $0x48] sm:$0xff]
      %v804 = vld [vmem:[#allocation2 + $0x50] sm:$0xff]
      %v805 = vld [vmem:[#allocation2 + $0x58] sm:$0xff]
      %v806 = vld [vmem:[#allocation2 + $0x60] sm:$0xff]
      %v807 = vld [vmem:[#allocation2 + $0x68] sm:$0xff]
      %v808 = vld [vmem:[#allocation2 + $0x70] sm:$0xff]
      %v809 = vld [vmem:[#allocation2 + $0x78] sm:$0xff]
      %v810 = vld [vmem:[#allocation2 + $0x80] sm:$0xff]
      %v811 = vld [vmem:[#allocation2 + $0x88] sm:$0xff]
      %v812 = vld [vmem:[%s7] sm:$0xff]
      %814 = vset.pattern.permute.xlu0 0
      %815 = vperm.xlu0 %814, %v812
      %v816 = vpop.permute.xlu0 %815
      %v819 = vsel %vm590, %v793, 0
      %821 = vmatpush.msra.mxu0 0.0
      %822 = vmatpush.msra.mxu0 0.0
      %823 = vmatpush.msra.mxu0 0.0
      %824 = vmatpush.msra.mxu0 0.0
      %825 = vmatpush.msra.mxu0 0.0
      %826 = vmatpush.msra.mxu0 0.0
      %827 = vmatpush.msra.mxu0 0.0
      %828 = vmatpush.msra.mxu0 %v810
      %829 = vmatpush.msra.mxu0 %v808
      %830 = vmatpush.msra.mxu0 %v806
      %831 = vmatpush.msra.mxu0 %v804
      %832 = vmatpush.msra.mxu0 %v802
      %833 = vmatpush.msra.mxu0 %v800
      %834 = vmatpush.msra.mxu0 %v798
      %835 = vmatpush.msra.mxu0 %v796
      %836 = vmatpush.msra.mxu0 %v794
      %837 = vmatmul.f32.gmra.mxu0 %v819
      %v838 = vpop.f32.mrf.mxu0
      %v839 = vadd.f32 %v816, %v838
      %840 = vdwg.mxu0
      %841 = vmatpush.msra.mxu0 0.0
      %842 = vmatpush.msra.mxu0 0.0
      %843 = vmatpush.msra.mxu0 0.0
      %844 = vmatpush.msra.mxu0 0.0
      %845 = vmatpush.msra.mxu0 0.0
      %846 = vmatpush.msra.mxu0 0.0
      %847 = vmatpush.msra.mxu0 0.0
      %848 = vmatpush.msra.mxu0 %v811
      %849 = vmatpush.msra.mxu0 %v809
      %850 = vmatpush.msra.mxu0 %v807
      %851 = vmatpush.msra.mxu0 %v805
      %852 = vmatpush.msra.mxu0 %v803
      %853 = vmatpush.msra.mxu0 %v801
      %854 = vmatpush.msra.mxu0 %v799
      %855 = vmatpush.msra.mxu0 %v797
      %856 = vmatpush.msra.mxu0 %v795
      %857 = vmatmul.f32.gmra.mxu0 %v819
      %v858 = vpop.f32.mrf.mxu0
      %v859 = vadd.f32 %v816, %v858
      %860 = vdwg.mxu0
      %vm861 = vcmp.gt.f32.partialorder %v839, 0.0
      %vm862 = vcmp.gt.f32.partialorder %v859, 0.0
      %v863 = vmul.f32 %v839, 0.01
      %v864 = vmul.f32 %v859, 0.01
      %v865 = vsel %vm861, %v839, %v863
      %v866 = vsel %vm862, %v859, %v864
      %v869 = vrot.slane %v866, 4
      %vm870 = vcmask 1043456
      %v871 = vsel %vm870, %v865, %v869
      %873 = vst [vmem:[%s325] sm:$0xff] %v871
      %p874 = scmp.lt.s32.totalorder %s19, 1
      %s875 = scalar_select %p874, %s19, 1
      %s876 = smul.addr %s875, 2
      %s877 = smul.addr %s876, 4
      %s878 = scalar_lea.vmem %s8, %s877
      // Predicated region
      $region53: #{concat_forward.1} parent=51 // pred_check
        %p879 = pneg %p215
      $region54: #{concat_forward.1} parent=51 // pred_check_branch
        %881 = sbr.rel (%p879) target = $region56
      $region55: #{concat_forward.1} parent=51 // pred_region
        _
      $region56: #{concat_forward.1} parent=51 // pred_fallthru
        _
    $region52: #{concat_forward.1} parent=5 // pred_fallthru
      _
    %p882 = scmp.le.s32.totalorder 2, %s14
    // Predicated region
    $region57: #{concat_forward.1} parent=5 // pred_check
      %p883 = pneg %p882
    $region58: #{concat_forward.1} parent=5 // pred_check_branch
      %885 = sbr.rel (%p883) target = $region60
    $region59: #{concat_forward.1} parent=5 // pred_region
      %s886 = ssub.s32 %s14, 2
      // Predicated region
      $region61: #{concat_forward.1} parent=59 // pred_check
        %p887 = pneg %p221
      $region62: #{concat_forward.1} parent=59 // pred_check_branch
        %889 = sbr.rel (%p887) target = $region64
      $region63: #{concat_forward.1} parent=59 // pred_region
        %p890 = scmp.lt.s32.totalorder %s20, 1
        %s891 = scalar_select %p890, %s20, 1
        %s892 = smul.addr %s891, 2
        %s893 = smul.addr %s892, 4
        %s894 = scalar_lea.vmem %s8, %s893
      $region64: #{concat_forward.1} parent=59 // pred_fallthru
        _
    $region60: #{concat_forward.1} parent=5 // pred_fallthru
      _
  $region6: #{concat_forward.1} parent=0 // loop_footer
    %s18 = sadd.s32 1, %s14
  $region7: #{concat_forward.1} parent=0 // loop_footer_branch
    %13 = sbr.rel target = $region3
  $region8: #{concat_forward.1} parent=0 // loop_exit
    _

</llo_original>
